<compile_context>
chip_gen: v7x
topology: tpu7x:2x2x1
jax: 0.10.0
libtpu: 0.0.40
codegen_flags: <defaults>
</compile_context>

<pallas_src>
import functools

import jax
import jax.numpy as jnp
from jax import lax
from jax.experimental import pallas as pl
from jax.experimental.pallas import tpu as pltpu


def _round_up(x, m):
    return (x + m - 1) // m * m


def _gru_kernel(emb_ref, wih_ref, whh_ref, bih_ref, bhh_ref,
                out_ref, h_scratch, gx_scratch,
                *, seq_len, chunk, bb, hp):
    """One grid step == one (batch-block, sequence-chunk) tile.

    emb_ref : (chunk, bb, hp)   embedded (and dropout'd) tokens for this chunk
    wih_ref : (hp, 3*hp)        W_ih^T, gate panels lane-aligned (r|z|n)
    whh_ref : (hp, 3*hp)        W_hh^T, gate panels lane-aligned (r|z|n)
    bih_ref : (1, 3*hp)         b_ih
    bhh_ref : (1, 3*hp)         b_hh
    out_ref : (bb, hp)          last-step hidden state for this batch block
    """
    c = pl.program_id(1)                      # sequential sequence-chunk axis
    n_chunks = pl.num_programs(1)

    @pl.when(c == 0)
    def _():
        h_scratch[...] = jnp.zeros_like(h_scratch)

    # Hoisted input projection: one large MXU matmul for the whole chunk.
    emb2d = emb_ref[...].reshape(chunk * bb, hp)
    gx_scratch[...] = (
        jnp.dot(emb2d, wih_ref[...], preferred_element_type=jnp.float32)
        + bih_ref[...])

    whh = whh_ref[...]                        # hoisted loads (reused every step)
    bhh = bhh_ref[...]

    def step(t, h):
        base = pl.multiple_of(t * bb, bb)
        gx = gx_scratch[pl.ds(base, bb), :]   # (bb, 3*hp), sublane-aligned rows
        gh = jnp.dot(h, whh, preferred_element_type=jnp.float32) + bhh
        # PyTorch GRU gate order r|z|n; slices are 128-lane-aligned panels.
        r = jax.nn.sigmoid(gx[:, 0 * hp:1 * hp] + gh[:, 0 * hp:1 * hp])
        z = jax.nn.sigmoid(gx[:, 1 * hp:2 * hp] + gh[:, 1 * hp:2 * hp])
        n = jnp.tanh(gx[:, 2 * hp:3 * hp] + r * gh[:, 2 * hp:3 * hp])
        h_new = (1.0 - z) * n + z * h
        # Mask out sequence-padding steps at the tail of the last chunk.
        return jnp.where(c * chunk + t < seq_len, h_new, h)

    h_final = lax.fori_loop(0, chunk, step, h_scratch[...], unroll=True)
    h_scratch[...] = h_final

    @pl.when(c == n_chunks - 1)
    def _():
        out_ref[...] = h_final.astype(out_ref.dtype)


def encoder_rnn_forward(training_pair, params, *, seq_chunk=8):
    """Mirrors EncoderRNN.forward for recurrent_unit='GRU', n_layers=1."""
    input_variable, _target_variable = training_pair  # target unused in forward
    S, B = input_variable.shape
    embedding = params["embedding"]
    w_ih, w_hh = params["w_ih"], params["w_hh"]
    b_ih, b_hh = params["b_ih"], params["b_hh"]
    H = embedding.shape[1]

    # Vreg-friendly padded sizes: batch -> sublane multiple, hidden -> lane mult.
    BB = 8                                    # batch rows per block (sublane tile)
    Hp = _round_up(H, 128)
    Bp = _round_up(max(B, BB), BB)
    T = min(seq_chunk, S)
    n_chunks = pl.cdiv(S, T)
    Sp = n_chunks * T
    n_bblocks = Bp // BB

    # Gate-panel-aligned, zero-padded parameters.
    def pad_w(w):                             # (3H, H) -> (Hp, 3*Hp)
        w3 = jnp.transpose(w.reshape(3, H, H), (0, 2, 1))      # (gate, in, out)
        w3 = jnp.pad(w3, ((0, 0), (0, Hp - H), (0, Hp - H)))
        return jnp.transpose(w3, (1, 0, 2)).reshape(Hp, 3 * Hp)

    def pad_b(b):                             # (3H,) -> (1, 3*Hp)
        return jnp.pad(b.reshape(3, H), ((0, 0), (0, Hp - H))).reshape(1, 3 * Hp)

    w_ih_t = pad_w(w_ih.astype(jnp.float32))
    w_hh_t = pad_w(w_hh.astype(jnp.float32))
    b_ih_r = pad_b(b_ih.astype(jnp.float32))
    b_hh_r = pad_b(b_hh.astype(jnp.float32))

    # Embedding gather (dropout is identity in eval mode), padded to (Sp,Bp,Hp).
    # Padded hidden columns / batch rows are zero and provably stay inert.
    emb_table = jnp.pad(embedding.astype(jnp.float32), ((0, 0), (0, Hp - H)))
    emb = emb_table[input_variable]                             # (S, B, Hp)
    emb = jnp.pad(emb, ((0, Sp - S), (0, Bp - B), (0, 0)))      # (Sp, Bp, Hp)

    kernel = functools.partial(_gru_kernel, seq_len=S, chunk=T, bb=BB, hp=Hp)

    h_last = pl.pallas_call(
        kernel,
        out_shape=jax.ShapeDtypeStruct((Bp, Hp), jnp.float32),
        grid_spec=pltpu.PrefetchScalarGridSpec(
            num_scalar_prefetch=0,
            grid=(n_bblocks, n_chunks),
            in_specs=[
                pl.BlockSpec((T, BB, Hp), lambda b, c: (c, b, 0)),   # emb chunk
                pl.BlockSpec((Hp, 3 * Hp), lambda b, c: (0, 0)),     # W_ih^T
                pl.BlockSpec((Hp, 3 * Hp), lambda b, c: (0, 0)),     # W_hh^T
                pl.BlockSpec((1, 3 * Hp), lambda b, c: (0, 0)),      # b_ih
                pl.BlockSpec((1, 3 * Hp), lambda b, c: (0, 0)),      # b_hh
            ],
            out_specs=pl.BlockSpec((BB, Hp), lambda b, c: (b, 0)),
            scratch_shapes=[
                pltpu.VMEM((BB, Hp), jnp.float32),           # carried hidden
                pltpu.VMEM((T * BB, 3 * Hp), jnp.float32),   # chunk input proj
            ]),
        compiler_params=pltpu.CompilerParams(
            dimension_semantics=("parallel", "arbitrary")),  # batch ||, time seq
    )(emb, w_ih_t, w_hh_t, b_ih_r, b_hh_r)

    h_last = h_last[:B, :H]
    out = h_last[None]                 # last-step RNN output, (1, B, H)
    hid = h_last[None]                 # h_n for n_layers=1,    (1, B, H)
    return out, hid


def _reference_forward(training_pair, params):
    """Pure-JAX reference (same math) for a correctness check."""
    input_variable, _ = training_pair
    emb = params["embedding"][input_variable]        # (S, B, H)
    H = emb.shape[-1]
    w_ih, w_hh, b_ih, b_hh = (params["w_ih"], params["w_hh"],
                              params["b_ih"], params["b_hh"])

    def cell(h, x):
        gx = x @ w_ih.T + b_ih
        gh = h @ w_hh.T + b_hh
        r = jax.nn.sigmoid(gx[:, :H] + gh[:, :H])
        z = jax.nn.sigmoid(gx[:, H:2 * H] + gh[:, H:2 * H])
        n = jnp.tanh(gx[:, 2 * H:] + r * gh[:, 2 * H:])
        h_new = (1.0 - z) * n + z * h
        return h_new, h_new

    h0 = jnp.zeros((emb.shape[1], H), jnp.float32)
    h_last, _ = jax.lax.scan(cell, h0, emb)
    return h_last[None], h_last[None]


if __name__ == "__main__":
    # Small shapes consistent with the module's forward.
    input_size = 20      # vocab
    hidden_size = 32
    seq_len = 10         # not a multiple of the chunk -> exercises tail masking
    batch = 2

    key = jax.random.PRNGKey(0)
    k_emb, k_wih, k_whh, k_bih, k_bhh, k_in, k_tgt = jax.random.split(key, 7)
    bound = 1.0 / (hidden_size ** 0.5)
    params = {
        "embedding": jax.random.uniform(k_emb, (input_size, hidden_size),
                                        jnp.float32, -bound, bound),
        "w_ih": jax.random.uniform(k_wih, (3 * hidden_size, hidden_size),
                                   jnp.float32, -bound, bound),
        "w_hh": jax.random.uniform(k_whh, (3 * hidden_size, hidden_size),
                                   jnp.float32, -bound, bound),
        "b_ih": jax.random.uniform(k_bih, (3 * hidden_size,),
                                   jnp.float32, -bound, bound),
        "b_hh": jax.random.uniform(k_bhh, (3 * hidden_size,),
                                   jnp.float32, -bound, bound),
    }

    input_variable = jax.random.randint(k_in, (seq_len, batch), 0, input_size,
                                        dtype=jnp.int32)
    target_variable = jax.random.randint(k_tgt, (seq_len, batch), 0, input_size,
                                         dtype=jnp.int32)
    training_pair = (input_variable, target_variable)

    output, hidden = encoder_rnn_forward(training_pair, params, seq_chunk=4)
    output = jax.block_until_ready(output)
    hidden = jax.block_until_ready(hidden)

    ref_out, ref_hid = _reference_forward(training_pair, params)
    assert output.shape == (1, batch, hidden_size)
    assert hidden.shape == (1, batch, hidden_size)
    assert jnp.allclose(output, ref_out, atol=1e-5, rtol=1e-5)
    assert jnp.allclose(hidden, ref_hid, atol=1e-5, rtol=1e-5)

    print("KERNEL_OK")
</pallas_src>

<mosaic_0001>
module attributes {stable_mosaic.version = 11 : i64} {
  func.func @_gru_kernel(%arg0: i32, %arg1: i32, %arg2: memref<4x8x128xf32, #tpu.memory_space<vmem>>, %arg3: memref<128x384xf32, #tpu.memory_space<vmem>>, %arg4: memref<128x384xf32, #tpu.memory_space<vmem>>, %arg5: memref<1x384xf32, #tpu.memory_space<vmem>>, %arg6: memref<1x384xf32, #tpu.memory_space<vmem>>, %arg7: memref<8x128xf32, #tpu.memory_space<vmem>>, %arg8: memref<8x128xf32, #tpu.memory_space<vmem>>, %arg9: memref<32x384xf32, #tpu.memory_space<vmem>>) attributes {dimension_semantics = [#tpu.dimension_semantics<parallel>, #tpu.dimension_semantics<arbitrary>], iteration_bounds = array<i64: 1, 3>, scalar_prefetch = 0 : i64, scratch_operands = 2 : i64, tpu.core_type = #tpu.core_type<tc>, window_params = [{transform_indices = @transform_0, window_bounds = array<i64: 4, 8, 128>}, {pipeline_mode = #tpu.pipeline_mode<synchronous>, transform_indices = @transform_1, window_bounds = array<i64: 128, 384>}, {pipeline_mode = #tpu.pipeline_mode<synchronous>, transform_indices = @transform_2, window_bounds = array<i64: 128, 384>}, {pipeline_mode = #tpu.pipeline_mode<synchronous>, transform_indices = @transform_3, window_bounds = array<i64: 1, 384>}, {pipeline_mode = #tpu.pipeline_mode<synchronous>, transform_indices = @transform_4, window_bounds = array<i64: 1, 384>}, {transform_indices = @transform_5, window_bounds = array<i64: 8, 128>}]} {
    %c0_i32 = arith.constant 0 : i32
    %0 = arith.cmpi eq, %arg1, %c0_i32 : i32
    %1 = arith.extui %0 : i1 to i32
    %c0_i32_0 = arith.constant 0 : i32
    %2 = arith.cmpi ne, %1, %c0_i32_0 : i32
    scf.if %2 {
      %cst_50 = arith.constant 0.000000e+00 : f32
      %166 = vector.broadcast %cst_50 : f32 to vector<8x128xf32>
      %c0_51 = arith.constant 0 : index
      %c0_52 = arith.constant 0 : index
      %167 = vector.load %arg8[%c0_51, %c0_52] : memref<8x128xf32, #tpu.memory_space<vmem>>, vector<8x128xf32>
      tpu.vector_store %arg8[%c0_51, %c0_52], %166 {strides = array<i32>} : memref<8x128xf32, #tpu.memory_space<vmem>>, vector<8x128xf32>,
    } else {
    }
    %c0 = arith.constant 0 : index
    %c0_1 = arith.constant 0 : index
    %c0_2 = arith.constant 0 : index
    %3 = vector.load %arg2[%c0, %c0_1, %c0_2] : memref<4x8x128xf32, #tpu.memory_space<vmem>>, vector<4x8x128xf32>
    %4 = vector.shape_cast %3 : vector<4x8x128xf32> to vector<32x128xf32>
    %c0_3 = arith.constant 0 : index
    %c0_4 = arith.constant 0 : index
    %5 = vector.load %arg3[%c0_3, %c0_4] : memref<128x384xf32, #tpu.memory_space<vmem>>, vector<128x384xf32>
    %cst = arith.constant dense<0.000000e+00> : vector<32x384xf32>
    %6 = tpu.matmul %4, %5, %cst {dimension_numbers = #tpu.dot_dimension_numbers<[1], [0], [0], [1], [0, 0, 1, 1], [], []>} : vector<32x128xf32>, vector<128x384xf32>, vector<32x384xf32> -> vector<32x384xf32>
    %c0_5 = arith.constant 0 : index
    %c0_6 = arith.constant 0 : index
    %7 = vector.load %arg5[%c0_5, %c0_6] : memref<1x384xf32, #tpu.memory_space<vmem>>, vector<1x384xf32>
    %8 = vector.broadcast %7 : vector<1x384xf32> to vector<32x384xf32>
    %9 = arith.addf %6, %8 : vector<32x384xf32>
    %c0_7 = arith.constant 0 : index
    %c0_8 = arith.constant 0 : index
    %10 = vector.load %arg9[%c0_7, %c0_8] : memref<32x384xf32, #tpu.memory_space<vmem>>, vector<32x384xf32>
    tpu.vector_store %arg9[%c0_7, %c0_8], %9 {strides = array<i32>} : memref<32x384xf32, #tpu.memory_space<vmem>>, vector<32x384xf32>,
    %c0_9 = arith.constant 0 : index
    %c0_10 = arith.constant 0 : index
    %11 = vector.load %arg4[%c0_9, %c0_10] : memref<128x384xf32, #tpu.memory_space<vmem>>, vector<128x384xf32>
    %c0_11 = arith.constant 0 : index
    %c0_12 = arith.constant 0 : index
    %12 = vector.load %arg6[%c0_11, %c0_12] : memref<1x384xf32, #tpu.memory_space<vmem>>, vector<1x384xf32>
    %c0_13 = arith.constant 0 : index
    %c0_14 = arith.constant 0 : index
    %13 = vector.load %arg8[%c0_13, %c0_14] : memref<8x128xf32, #tpu.memory_space<vmem>>, vector<8x128xf32>
    %c0_i32_15 = arith.constant 0 : i32
    %c8_i32 = arith.constant 8 : i32
    %14 = arith.muli %c0_i32_15, %c8_i32 : i32
    %15 = tpu.assume_multiple %14, 8 : i32
    %16 = arith.index_cast %15 : i32 to index
    %c0_16 = arith.constant 0 : index
    %17 = vector.load %arg9[%16, %c0_16] : memref<32x384xf32, #tpu.memory_space<vmem>>, vector<8x384xf32>
    %cst_17 = arith.constant dense<0.000000e+00> : vector<8x384xf32>
    %18 = tpu.matmul %13, %11, %cst_17 {dimension_numbers = #tpu.dot_dimension_numbers<[1], [0], [0], [1], [0, 0, 1, 1], [], []>} : vector<8x128xf32>, vector<128x384xf32>, vector<8x384xf32> -> vector<8x384xf32>
    %19 = vector.broadcast %12 : vector<1x384xf32> to vector<8x384xf32>
    %20 = arith.addf %18, %19 : vector<8x384xf32>
    %21 = vector.extract_strided_slice %17 {offsets = [0, 0], sizes = [8, 128], strides = [1, 1]} : vector<8x384xf32> to vector<8x128xf32>
    %22 = vector.extract_strided_slice %20 {offsets = [0, 0], sizes = [8, 128], strides = [1, 1]} : vector<8x384xf32> to vector<8x128xf32>
    %23 = arith.addf %21, %22 : vector<8x128xf32>
    %24 = arith.negf %23 : vector<8x128xf32>
    %25 = math.exp %24 : vector<8x128xf32>
    %cst_18 = arith.constant 1.000000e+00 : f32
    %26 = vector.broadcast %cst_18 : f32 to vector<8x128xf32>
    %27 = arith.addf %26, %25 : vector<8x128xf32>
    %28 = arith.divf %26, %27 : vector<8x128xf32>
    %29 = vector.extract_strided_slice %17 {offsets = [0, 128], sizes = [8, 128], strides = [1, 1]} : vector<8x384xf32> to vector<8x128xf32>
    %30 = vector.extract_strided_slice %20 {offsets = [0, 128], sizes = [8, 128], strides = [1, 1]} : vector<8x384xf32> to vector<8x128xf32>
    %31 = arith.addf %29, %30 : vector<8x128xf32>
    %32 = arith.negf %31 : vector<8x128xf32>
    %33 = math.exp %32 : vector<8x128xf32>
    %cst_19 = arith.constant 1.000000e+00 : f32
    %34 = vector.broadcast %cst_19 : f32 to vector<8x128xf32>
    %35 = arith.addf %34, %33 : vector<8x128xf32>
    %36 = arith.divf %34, %35 : vector<8x128xf32>
    %37 = vector.extract_strided_slice %17 {offsets = [0, 256], sizes = [8, 128], strides = [1, 1]} : vector<8x384xf32> to vector<8x128xf32>
    %38 = vector.extract_strided_slice %20 {offsets = [0, 256], sizes = [8, 128], strides = [1, 1]} : vector<8x384xf32> to vector<8x128xf32>
    %39 = arith.mulf %28, %38 : vector<8x128xf32>
    %40 = arith.addf %37, %39 : vector<8x128xf32>
    %41 = math.tanh %40 : vector<8x128xf32>
    %cst_20 = arith.constant 1.000000e+00 : f32
    %42 = vector.broadcast %cst_20 : f32 to vector<8x128xf32>
    %43 = arith.subf %42, %36 : vector<8x128xf32>
    %44 = arith.mulf %43, %41 : vector<8x128xf32>
    %45 = arith.mulf %36, %13 : vector<8x128xf32>
    %46 = arith.addf %44, %45 : vector<8x128xf32>
    %c4_i32 = arith.constant 4 : i32
    %47 = arith.muli %arg1, %c4_i32 : i32
    %48 = arith.addi %47, %c0_i32_15 : i32
    %c10_i32 = arith.constant 10 : i32
    %49 = arith.cmpi slt, %48, %c10_i32 : i32
    %50 = arith.select %49, %46, %13 : vector<8x128xf32>
    %c1_i32 = arith.constant 1 : i32
    %c8_i32_21 = arith.constant 8 : i32
    %51 = arith.muli %c1_i32, %c8_i32_21 : i32
    %52 = tpu.assume_multiple %51, 8 : i32
    %53 = arith.index_cast %52 : i32 to index
    %c0_22 = arith.constant 0 : index
    %54 = vector.load %arg9[%53, %c0_22] : memref<32x384xf32, #tpu.memory_space<vmem>>, vector<8x384xf32>
    %cst_23 = arith.constant dense<0.000000e+00> : vector<8x384xf32>
    %55 = tpu.matmul %50, %11, %cst_23 {dimension_numbers = #tpu.dot_dimension_numbers<[1], [0], [0], [1], [0, 0, 1, 1], [], []>} : vector<8x128xf32>, vector<128x384xf32>, vector<8x384xf32> -> vector<8x384xf32>
    %56 = vector.broadcast %12 : vector<1x384xf32> to vector<8x384xf32>
    %57 = arith.addf %55, %56 : vector<8x384xf32>
    %58 = vector.extract_strided_slice %54 {offsets = [0, 0], sizes = [8, 128], strides = [1, 1]} : vector<8x384xf32> to vector<8x128xf32>
    %59 = vector.extract_strided_slice %57 {offsets = [0, 0], sizes = [8, 128], strides = [1, 1]} : vector<8x384xf32> to vector<8x128xf32>
    %60 = arith.addf %58, %59 : vector<8x128xf32>
    %61 = arith.negf %60 : vector<8x128xf32>
    %62 = math.exp %61 : vector<8x128xf32>
    %cst_24 = arith.constant 1.000000e+00 : f32
    %63 = vector.broadcast %cst_24 : f32 to vector<8x128xf32>
    %64 = arith.addf %63, %62 : vector<8x128xf32>
    %65 = arith.divf %63, %64 : vector<8x128xf32>
    %66 = vector.extract_strided_slice %54 {offsets = [0, 128], sizes = [8, 128], strides = [1, 1]} : vector<8x384xf32> to vector<8x128xf32>
    %67 = vector.extract_strided_slice %57 {offsets = [0, 128], sizes = [8, 128], strides = [1, 1]} : vector<8x384xf32> to vector<8x128xf32>
    %68 = arith.addf %66, %67 : vector<8x128xf32>
    %69 = arith.negf %68 : vector<8x128xf32>
    %70 = math.exp %69 : vector<8x128xf32>
    %cst_25 = arith.constant 1.000000e+00 : f32
    %71 = vector.broadcast %cst_25 : f32 to vector<8x128xf32>
    %72 = arith.addf %71, %70 : vector<8x128xf32>
    %73 = arith.divf %71, %72 : vector<8x128xf32>
    %74 = vector.extract_strided_slice %54 {offsets = [0, 256], sizes = [8, 128], strides = [1, 1]} : vector<8x384xf32> to vector<8x128xf32>
    %75 = vector.extract_strided_slice %57 {offsets = [0, 256], sizes = [8, 128], strides = [1, 1]} : vector<8x384xf32> to vector<8x128xf32>
    %76 = arith.mulf %65, %75 : vector<8x128xf32>
    %77 = arith.addf %74, %76 : vector<8x128xf32>
    %78 = math.tanh %77 : vector<8x128xf32>
    %cst_26 = arith.constant 1.000000e+00 : f32
    %79 = vector.broadcast %cst_26 : f32 to vector<8x128xf32>
    %80 = arith.subf %79, %73 : vector<8x128xf32>
    %81 = arith.mulf %80, %78 : vector<8x128xf32>
    %82 = arith.mulf %73, %50 : vector<8x128xf32>
    %83 = arith.addf %81, %82 : vector<8x128xf32>
    %c4_i32_27 = arith.constant 4 : i32
    %84 = arith.muli %arg1, %c4_i32_27 : i32
    %85 = arith.addi %84, %c1_i32 : i32
    %c10_i32_28 = arith.constant 10 : i32
    %86 = arith.cmpi slt, %85, %c10_i32_28 : i32
    %87 = arith.select %86, %83, %50 : vector<8x128xf32>
    %c2_i32 = arith.constant 2 : i32
    %c8_i32_29 = arith.constant 8 : i32
    %88 = arith.muli %c2_i32, %c8_i32_29 : i32
    %89 = tpu.assume_multiple %88, 8 : i32
    %90 = arith.index_cast %89 : i32 to index
    %c0_30 = arith.constant 0 : index
    %91 = vector.load %arg9[%90, %c0_30] : memref<32x384xf32, #tpu.memory_space<vmem>>, vector<8x384xf32>
    %cst_31 = arith.constant dense<0.000000e+00> : vector<8x384xf32>
    %92 = tpu.matmul %87, %11, %cst_31 {dimension_numbers = #tpu.dot_dimension_numbers<[1], [0], [0], [1], [0, 0, 1, 1], [], []>} : vector<8x128xf32>, vector<128x384xf32>, vector<8x384xf32> -> vector<8x384xf32>
    %93 = vector.broadcast %12 : vector<1x384xf32> to vector<8x384xf32>
    %94 = arith.addf %92, %93 : vector<8x384xf32>
    %95 = vector.extract_strided_slice %91 {offsets = [0, 0], sizes = [8, 128], strides = [1, 1]} : vector<8x384xf32> to vector<8x128xf32>
    %96 = vector.extract_strided_slice %94 {offsets = [0, 0], sizes = [8, 128], strides = [1, 1]} : vector<8x384xf32> to vector<8x128xf32>
    %97 = arith.addf %95, %96 : vector<8x128xf32>
    %98 = arith.negf %97 : vector<8x128xf32>
    %99 = math.exp %98 : vector<8x128xf32>
    %cst_32 = arith.constant 1.000000e+00 : f32
    %100 = vector.broadcast %cst_32 : f32 to vector<8x128xf32>
    %101 = arith.addf %100, %99 : vector<8x128xf32>
    %102 = arith.divf %100, %101 : vector<8x128xf32>
    %103 = vector.extract_strided_slice %91 {offsets = [0, 128], sizes = [8, 128], strides = [1, 1]} : vector<8x384xf32> to vector<8x128xf32>
    %104 = vector.extract_strided_slice %94 {offsets = [0, 128], sizes = [8, 128], strides = [1, 1]} : vector<8x384xf32> to vector<8x128xf32>
    %105 = arith.addf %103, %104 : vector<8x128xf32>
    %106 = arith.negf %105 : vector<8x128xf32>
    %107 = math.exp %106 : vector<8x128xf32>
    %cst_33 = arith.constant 1.000000e+00 : f32
    %108 = vector.broadcast %cst_33 : f32 to vector<8x128xf32>
    %109 = arith.addf %108, %107 : vector<8x128xf32>
    %110 = arith.divf %108, %109 : vector<8x128xf32>
    %111 = vector.extract_strided_slice %91 {offsets = [0, 256], sizes = [8, 128], strides = [1, 1]} : vector<8x384xf32> to vector<8x128xf32>
    %112 = vector.extract_strided_slice %94 {offsets = [0, 256], sizes = [8, 128], strides = [1, 1]} : vector<8x384xf32> to vector<8x128xf32>
    %113 = arith.mulf %102, %112 : vector<8x128xf32>
    %114 = arith.addf %111, %113 : vector<8x128xf32>
    %115 = math.tanh %114 : vector<8x128xf32>
    %cst_34 = arith.constant 1.000000e+00 : f32
    %116 = vector.broadcast %cst_34 : f32 to vector<8x128xf32>
    %117 = arith.subf %116, %110 : vector<8x128xf32>
    %118 = arith.mulf %117, %115 : vector<8x128xf32>
    %119 = arith.mulf %110, %87 : vector<8x128xf32>
    %120 = arith.addf %118, %119 : vector<8x128xf32>
    %c4_i32_35 = arith.constant 4 : i32
    %121 = arith.muli %arg1, %c4_i32_35 : i32
    %122 = arith.addi %121, %c2_i32 : i32
    %c10_i32_36 = arith.constant 10 : i32
    %123 = arith.cmpi slt, %122, %c10_i32_36 : i32
    %124 = arith.select %123, %120, %87 : vector<8x128xf32>
    %c3_i32 = arith.constant 3 : i32
    %c8_i32_37 = arith.constant 8 : i32
    %125 = arith.muli %c3_i32, %c8_i32_37 : i32
    %126 = tpu.assume_multiple %125, 8 : i32
    %127 = arith.index_cast %126 : i32 to index
    %c0_38 = arith.constant 0 : index
    %128 = vector.load %arg9[%127, %c0_38] : memref<32x384xf32, #tpu.memory_space<vmem>>, vector<8x384xf32>
    %cst_39 = arith.constant dense<0.000000e+00> : vector<8x384xf32>
    %129 = tpu.matmul %124, %11, %cst_39 {dimension_numbers = #tpu.dot_dimension_numbers<[1], [0], [0], [1], [0, 0, 1, 1], [], []>} : vector<8x128xf32>, vector<128x384xf32>, vector<8x384xf32> -> vector<8x384xf32>
    %130 = vector.broadcast %12 : vector<1x384xf32> to vector<8x384xf32>
    %131 = arith.addf %129, %130 : vector<8x384xf32>
    %132 = vector.extract_strided_slice %128 {offsets = [0, 0], sizes = [8, 128], strides = [1, 1]} : vector<8x384xf32> to vector<8x128xf32>
    %133 = vector.extract_strided_slice %131 {offsets = [0, 0], sizes = [8, 128], strides = [1, 1]} : vector<8x384xf32> to vector<8x128xf32>
    %134 = arith.addf %132, %133 : vector<8x128xf32>
    %135 = arith.negf %134 : vector<8x128xf32>
    %136 = math.exp %135 : vector<8x128xf32>
    %cst_40 = arith.constant 1.000000e+00 : f32
    %137 = vector.broadcast %cst_40 : f32 to vector<8x128xf32>
    %138 = arith.addf %137, %136 : vector<8x128xf32>
    %139 = arith.divf %137, %138 : vector<8x128xf32>
    %140 = vector.extract_strided_slice %128 {offsets = [0, 128], sizes = [8, 128], strides = [1, 1]} : vector<8x384xf32> to vector<8x128xf32>
    %141 = vector.extract_strided_slice %131 {offsets = [0, 128], sizes = [8, 128], strides = [1, 1]} : vector<8x384xf32> to vector<8x128xf32>
    %142 = arith.addf %140, %141 : vector<8x128xf32>
    %143 = arith.negf %142 : vector<8x128xf32>
    %144 = math.exp %143 : vector<8x128xf32>
    %cst_41 = arith.constant 1.000000e+00 : f32
    %145 = vector.broadcast %cst_41 : f32 to vector<8x128xf32>
    %146 = arith.addf %145, %144 : vector<8x128xf32>
    %147 = arith.divf %145, %146 : vector<8x128xf32>
    %148 = vector.extract_strided_slice %128 {offsets = [0, 256], sizes = [8, 128], strides = [1, 1]} : vector<8x384xf32> to vector<8x128xf32>
    %149 = vector.extract_strided_slice %131 {offsets = [0, 256], sizes = [8, 128], strides = [1, 1]} : vector<8x384xf32> to vector<8x128xf32>
    %150 = arith.mulf %139, %149 : vector<8x128xf32>
    %151 = arith.addf %148, %150 : vector<8x128xf32>
    %152 = math.tanh %151 : vector<8x128xf32>
    %cst_42 = arith.constant 1.000000e+00 : f32
    %153 = vector.broadcast %cst_42 : f32 to vector<8x128xf32>
    %154 = arith.subf %153, %147 : vector<8x128xf32>
    %155 = arith.mulf %154, %152 : vector<8x128xf32>
    %156 = arith.mulf %147, %124 : vector<8x128xf32>
    %157 = arith.addf %155, %156 : vector<8x128xf32>
    %c4_i32_43 = arith.constant 4 : i32
    %158 = arith.muli %arg1, %c4_i32_43 : i32
    %159 = arith.addi %158, %c3_i32 : i32
    %c10_i32_44 = arith.constant 10 : i32
    %160 = arith.cmpi slt, %159, %c10_i32_44 : i32
    %161 = arith.select %160, %157, %124 : vector<8x128xf32>
    %c4_i32_45 = arith.constant 4 : i32
    %c0_46 = arith.constant 0 : index
    %c0_47 = arith.constant 0 : index
    %162 = vector.load %arg8[%c0_46, %c0_47] : memref<8x128xf32, #tpu.memory_space<vmem>>, vector<8x128xf32>
    tpu.vector_store %arg8[%c0_46, %c0_47], %161 {strides = array<i32>} : memref<8x128xf32, #tpu.memory_space<vmem>>, vector<8x128xf32>,
    %c2_i32_48 = arith.constant 2 : i32
    %163 = arith.cmpi eq, %arg1, %c2_i32_48 : i32
    %164 = arith.extui %163 : i1 to i32
    %c0_i32_49 = arith.constant 0 : i32
    %165 = arith.cmpi ne, %164, %c0_i32_49 : i32
    scf.if %165 {
      %c0_50 = arith.constant 0 : index
      %c0_51 = arith.constant 0 : index
      %166 = vector.load %arg7[%c0_50, %c0_51] : memref<8x128xf32, #tpu.memory_space<vmem>>, vector<8x128xf32>
      tpu.vector_store %arg7[%c0_50, %c0_51], %161 {strides = array<i32>} : memref<8x128xf32, #tpu.memory_space<vmem>>, vector<8x128xf32>,
    } else {
    }
    return
  }
  func.func @transform_0(%arg0: i32, %arg1: i32) -> (i32, i32, i32) {
    %c0_i32 = arith.constant 0 : i32
    %c0_i32_0 = arith.constant 0 : i32
    return %arg1, %arg0, %c0_i32 : i32, i32, i32
  }
  func.func @transform_1(%arg0: i32, %arg1: i32) -> (i32, i32) {
    %c0_i32 = arith.constant 0 : i32
    %c0_i32_0 = arith.constant 0 : i32
    %c0_i32_1 = arith.constant 0 : i32
    return %c0_i32, %c0_i32_0 : i32, i32
  }
  func.func @transform_2(%arg0: i32, %arg1: i32) -> (i32, i32) {
    %c0_i32 = arith.constant 0 : i32
    %c0_i32_0 = arith.constant 0 : i32
    %c0_i32_1 = arith.constant 0 : i32
    return %c0_i32, %c0_i32_0 : i32, i32
  }
  func.func @transform_3(%arg0: i32, %arg1: i32) -> (i32, i32) {
    %c0_i32 = arith.constant 0 : i32
    %c0_i32_0 = arith.constant 0 : i32
    %c0_i32_1 = arith.constant 0 : i32
    return %c0_i32, %c0_i32_0 : i32, i32
  }
  func.func @transform_4(%arg0: i32, %arg1: i32) -> (i32, i32) {
    %c0_i32 = arith.constant 0 : i32
    %c0_i32_0 = arith.constant 0 : i32
    %c0_i32_1 = arith.constant 0 : i32
    return %c0_i32, %c0_i32_0 : i32, i32
  }
  func.func @transform_5(%arg0: i32, %arg1: i32) -> (i32, i32) {
    %c0_i32 = arith.constant 0 : i32
    %c0_i32_0 = arith.constant 0 : i32
    return %arg0, %c0_i32 : i32, i32
  }
}

</mosaic_0001>

<llo_original>
// kernel: tpu_custom_call.1
$region0: #{tpu_custom_call.1}
  #allocation0 [shape = 'u32[]', space=smem, size = 0x4, offset = 0x4, fixed_abs, tag = 'smem constant byte address 0x4 - core index']
  #allocation1 [shape = 'u32[144,128]{1,0:T(1,128)}', space=vmem, size = 0x12000, scoped, tag = 'internal scratch']
  #allocation2 [shape = 'f32[8,128]{1,0:T(8,128)}', space=vmem, size = 0x1000, scoped, tag = 'scratch operand']
  #allocation3 [shape = 'f32[32,384]{1,0:T(8,128)}', space=vmem, size = 0xc000, scoped, tag = 'scratch operand']
  %s0 = inlined_call_operand.hbm [shape: f32[12,8,128], index: 0, kind: input, shape index: {}]
  %s1 = inlined_call_operand.hbm [shape: f32[128,384], index: 1, kind: input, shape index: {}]
  %s2 = inlined_call_operand.hbm [shape: f32[128,384], index: 2, kind: input, shape index: {}]
  %s3 = inlined_call_operand.vmem [shape: f32[1,384], index: 3, kind: input, shape index: {}]
  %s4 = inlined_call_operand.vmem [shape: f32[1,384], index: 4, kind: input, shape index: {}]
  %s5 = inlined_call_operand.hbm [shape: f32[8,128], index: 5, kind: output, shape index: {}]
  %s6 = sld [smem:[#allocation0]]
  $region73: #{tpu_custom_call.1} parent=0
    _
  %s8 = ssub.s32 1, %s6
  %s9 = scalar_select 0, %s8, %s6
  $region1: #{tpu_custom_call.1} parent=0
    #allocation4 [shape = 'u8[32768]{0}', space=vmem, size = 0x8000, scoped, tag = 'input window, operand 0']
    #allocation5 [shape = 's32[2]{0}', space=sflag, size = 0x8, scoped, tag = 'scoped memory for tpu_custom_call.1']
    #allocation6 [shape = 's32[2]{0}', space=sflag, size = 0x8, scoped, tag = 'scoped memory for tpu_custom_call.1']
    #allocation7 [shape = 'u8[196608]{0}', space=vmem, size = 0x30000, scoped, tag = 'input window, operand 1, single buffered']
    #allocation8 [shape = 's32[1]{0}', space=sflag, size = 0x4, scoped, tag = 'scoped memory for tpu_custom_call.1']
    #allocation9 [shape = 'u8[196608]{0}', space=vmem, size = 0x30000, scoped, tag = 'input window, operand 2, single buffered']
    #allocation10 [shape = 'u8[4096]{0}', space=vmem, size = 0x1000, scoped, tag = 'output window, operand 0, single buffered']
    %10 = vsyncpa [#allocation5], 0
    %s11 = scalar_lea.sflag [#allocation5], 1
    %12 = vsyncpa %s11, 0
    %13 = vsyncpa [#allocation8], 0
    %14 = vsyncpa [#allocation6], 0
    loop: start=0, step=1, limit=5
    $region2: #{tpu_custom_call.1} parent=1 // loop_pre_header
      _
    $region3: #{tpu_custom_call.1} parent=1 // loop_header
      %s16 = sphi 0, %s20
      %p17 = scmp.ge.s32.totalorder %s16, 5
      %s23 = sphi 0, %s35
      %s24 = sphi 0, %s31
      %s25 = sphi 0, %s23
      %s26 = sphi 0, %s24
      %s27 = sphi 0, %s25
      %s28 = sphi 0, %s26
      %s40 = sphi 0, %s42
      %s43 = sphi 0, %s40
      %s44 = sphi 0, %s43
      %s60 = sphi 0, %s44
      %s64 = sphi 0, %s64
      %s66 = sphi 0, %s64
      %s67 = sphi 0, %s66
      %s81 = sphi 0, %s67
      %s85 = sphi 0, %s85
      %s87 = sphi 0, %s85
      %s88 = sphi 0, %s87
      %s102 = sphi 0, %s88
      %s106 = sphi 0, %s106
      %s108 = sphi 0, %s106
      %s109 = sphi 0, %s108
      %s123 = sphi 0, %s109
      %s127 = sphi 0, %s127
      %s129 = sphi 0, %s127
      %s130 = sphi 0, %s129
      %s144 = sphi 0, %s130
      %s150 = sphi 0, %s152
      %s153 = sphi 0, %s150
      %s154 = sphi 0, %s153
      %s170 = sphi 0, %s154
    $region4: #{tpu_custom_call.1} parent=1 // loop_header_branch
      %19 = sbr.rel (%p17) target = $region8
    $region5: #{tpu_custom_call.1} parent=1 // loop_body
      %s21 = ssub.s32 %s16, 1
      %s22 = ssub.s32 %s16, 2
      %s29 = sadd.s32 1, %s24
      %p30 = scmp.ge.s32.totalorder %s29, 3
      %s31 = scalar_select %p30, 0, %s29
      %s32 = sadd.s32 1, %s23
      %s33 = scalar_select %p30, %s32, %s23
      %p34 = scmp.ge.s32.totalorder %s33, 1
      %s35 = scalar_select %p34, 0, %s33
      %s36 = ssub.s32 %s24, %s31
      %s37 = ssub.s32 %s23, %s35
      %s38 = sor.u32 %s36, %s37
      %p39 = scmp.eq.s32.totalorder %s38, 0
      %s41 = sadd.s32 %s40, 1
      %s42 = scalar_select %p39, %s40, %s41
      %p45 = pneg %p39
      %p46 = scmp.eq.s32.totalorder %s16, 2
      %p47 = por %p45, %p46
      %p48 = scmp.ne.s32.totalorder %s40, %s43
      %p49 = scmp.eq.s32.totalorder %s16, 0
      %p50 = por %p48, %p49
      %p51 = scmp.ne.s32.totalorder %s40, %s43
      %p52 = scmp.eq.s32.totalorder %s21, 2
      %p53 = por %p51, %p52
      %p54 = scmp.ne.s32.totalorder %s43, %s44
      %p55 = scmp.eq.s32.totalorder %s21, 0
      %p56 = por %p54, %p55
      %p57 = scmp.ne.s32.totalorder %s43, %s44
      %p58 = scmp.eq.s32.totalorder %s22, 2
      %p59 = por %p57, %p58
      %p61 = scmp.ne.s32.totalorder %s44, %s60
      %p62 = scmp.eq.s32.totalorder %s22, 0
      %p63 = por %p61, %p62
      %s65 = sadd.s32 %s64, 1
      %p68 = scmp.eq.s32.totalorder %s16, 2
      %p69 = scmp.ne.s32.totalorder %s64, %s66
      %p70 = scmp.eq.s32.totalorder %s16, 0
      %p71 = por %p69, %p70
      %p72 = scmp.ne.s32.totalorder %s64, %s66
      %p73 = scmp.eq.s32.totalorder %s21, 2
      %p74 = por %p72, %p73
      %p75 = scmp.ne.s32.totalorder %s66, %s67
      %p76 = scmp.eq.s32.totalorder %s21, 0
      %p77 = por %p75, %p76
      %p78 = scmp.ne.s32.totalorder %s66, %s67
      %p79 = scmp.eq.s32.totalorder %s22, 2
      %p80 = por %p78, %p79
      %p82 = scmp.ne.s32.totalorder %s67, %s81
      %p83 = scmp.eq.s32.totalorder %s22, 0
      %p84 = por %p82, %p83
      %s86 = sadd.s32 %s85, 1
      %p89 = scmp.eq.s32.totalorder %s16, 2
      %p90 = scmp.ne.s32.totalorder %s85, %s87
      %p91 = scmp.eq.s32.totalorder %s16, 0
      %p92 = por %p90, %p91
      %p93 = scmp.ne.s32.totalorder %s85, %s87
      %p94 = scmp.eq.s32.totalorder %s21, 2
      %p95 = por %p93, %p94
      %p96 = scmp.ne.s32.totalorder %s87, %s88
      %p97 = scmp.eq.s32.totalorder %s21, 0
      %p98 = por %p96, %p97
      %p99 = scmp.ne.s32.totalorder %s87, %s88
      %p100 = scmp.eq.s32.totalorder %s22, 2
      %p101 = por %p99, %p100
      %p103 = scmp.ne.s32.totalorder %s88, %s102
      %p104 = scmp.eq.s32.totalorder %s22, 0
      %p105 = por %p103, %p104
      %s107 = sadd.s32 %s106, 1
      %p110 = scmp.eq.s32.totalorder %s16, 2
      %p111 = scmp.ne.s32.totalorder %s106, %s108
      %p112 = scmp.eq.s32.totalorder %s16, 0
      %p113 = por %p111, %p112
      %p114 = scmp.ne.s32.totalorder %s106, %s108
      %p115 = scmp.eq.s32.totalorder %s21, 2
      %p116 = por %p114, %p115
      %p117 = scmp.ne.s32.totalorder %s108, %s109
      %p118 = scmp.eq.s32.totalorder %s21, 0
      %p119 = por %p117, %p118
      %p120 = scmp.ne.s32.totalorder %s108, %s109
      %p121 = scmp.eq.s32.totalorder %s22, 2
      %p122 = por %p120, %p121
      %p124 = scmp.ne.s32.totalorder %s109, %s123
      %p125 = scmp.eq.s32.totalorder %s22, 0
      %p126 = por %p124, %p125
      %s128 = sadd.s32 %s127, 1
      %p131 = scmp.eq.s32.totalorder %s16, 2
      %p132 = scmp.ne.s32.totalorder %s127, %s129
      %p133 = scmp.eq.s32.totalorder %s16, 0
      %p134 = por %p132, %p133
      %p135 = scmp.ne.s32.totalorder %s127, %s129
      %p136 = scmp.eq.s32.totalorder %s21, 2
      %p137 = por %p135, %p136
      %p138 = scmp.ne.s32.totalorder %s129, %s130
      %p139 = scmp.eq.s32.totalorder %s21, 0
      %p140 = por %p138, %p139
      %p141 = scmp.ne.s32.totalorder %s129, %s130
      %p142 = scmp.eq.s32.totalorder %s22, 2
      %p143 = por %p141, %p142
      %p145 = scmp.ne.s32.totalorder %s130, %s144
      %p146 = scmp.eq.s32.totalorder %s22, 0
      %p147 = por %p145, %p146
      %s148 = ssub.s32 %s23, %s35
      %p149 = scmp.eq.s32.totalorder %s148, 0
      %s151 = sadd.s32 %s150, 1
      %s152 = scalar_select %p149, %s150, %s151
      %p155 = pneg %p149
      %p156 = scmp.eq.s32.totalorder %s16, 2
      %p157 = por %p155, %p156
      %p158 = scmp.ne.s32.totalorder %s150, %s153
      %p159 = scmp.eq.s32.totalorder %s16, 0
      %p160 = por %p158, %p159
      %p161 = scmp.ne.s32.totalorder %s150, %s153
      %p162 = scmp.eq.s32.totalorder %s21, 2
      %p163 = por %p161, %p162
      %p164 = scmp.ne.s32.totalorder %s153, %s154
      %p165 = scmp.eq.s32.totalorder %s21, 0
      %p166 = por %p164, %p165
      %p167 = scmp.ne.s32.totalorder %s153, %s154
      %p168 = scmp.eq.s32.totalorder %s22, 2
      %p169 = por %p167, %p168
      %p171 = scmp.ne.s32.totalorder %s154, %s170
      %p172 = scmp.eq.s32.totalorder %s22, 0
      %p173 = por %p171, %p172
      %p174 = scmp.le.s32.totalorder 1, %s16
      %p175 = scmp.lt.s32.totalorder %s16, 4
      %p176 = pnand %p174, %p175
      %p177 = pneg %p176
      // Predicated region
      $region9: #{tpu_custom_call.1} parent=5 // pred_check
        _
      $region10: #{tpu_custom_call.1} parent=5 // pred_check_branch
        %179 = sbr.rel (%p176) target = $region12
      $region11: #{tpu_custom_call.1} parent=5 // pred_region
        %s180 = ssub.s32 %s16, 1
        // Predicated region
        $region13: #{tpu_custom_call.1} parent=11 // pred_check
          %p181 = pneg %p77
        $region14: #{tpu_custom_call.1} parent=11 // pred_check_branch
          %183 = sbr.rel (%p181) target = $region16
        $region15: #{tpu_custom_call.1} parent=11 // pred_region
          %s185 = ssub.s32 6144, 6144
          %186 = vsyncadd [#allocation8], %s185
          %s187 = sshll.u32 [#allocation7], 4
          %s188 = int_to_ptr.vmem [resolvable:$true] %s187
          %193 = dma.hbm_to_vmem [thread:$0]  %s1, 6144, %s188, [#allocation8], 384, 384, 24
        $region16: #{tpu_custom_call.1} parent=11 // pred_fallthru
          _
        // Predicated region
        $region17: #{tpu_custom_call.1} parent=11 // pred_check
          %p194 = pneg %p98
        $region18: #{tpu_custom_call.1} parent=11 // pred_check_branch
          %196 = sbr.rel (%p194) target = $region20
        $region19: #{tpu_custom_call.1} parent=11 // pred_region
          %s198 = ssub.s32 6144, 6144
          %199 = vsyncadd [#allocation8], %s198
          %s200 = sshll.u32 [#allocation9], 4
          %s201 = int_to_ptr.vmem [resolvable:$true] %s200
          %206 = dma.hbm_to_vmem [thread:$0]  %s2, 6144, %s201, [#allocation8], 384, 384, 24
        $region20: #{tpu_custom_call.1} parent=11 // pred_fallthru
          _
        // Predicated region
        $region21: #{tpu_custom_call.1} parent=11 // pred_check
          %p207 = pneg %p119
        $region22: #{tpu_custom_call.1} parent=11 // pred_check_branch
          %209 = sbr.rel (%p207) target = $region24
        $region23: #{tpu_custom_call.1} parent=11 // pred_region
          _
        $region24: #{tpu_custom_call.1} parent=11 // pred_fallthru
          _
        // Predicated region
        $region25: #{tpu_custom_call.1} parent=11 // pred_check
          %p210 = pneg %p140
        $region26: #{tpu_custom_call.1} parent=11 // pred_check_branch
          %212 = sbr.rel (%p210) target = $region28
        $region27: #{tpu_custom_call.1} parent=11 // pred_region
          _
        $region28: #{tpu_custom_call.1} parent=11 // pred_fallthru
          _
      $region12: #{tpu_custom_call.1} parent=5 // pred_fallthru
        _
      %p213 = scmp.lt.s32.totalorder %s16, 3
      // Predicated region
      $region29: #{tpu_custom_call.1} parent=5 // pred_check
        %p214 = pneg %p213
      $region30: #{tpu_custom_call.1} parent=5 // pred_check_branch
        %216 = sbr.rel (%p214) target = $region32
      $region31: #{tpu_custom_call.1} parent=5 // pred_region
        // Predicated region
        $region33: #{tpu_custom_call.1} parent=31 // pred_check
          %p217 = pneg %p50
        $region34: #{tpu_custom_call.1} parent=31 // pred_check_branch
          %219 = sbr.rel (%p217) target = $region36
        $region35: #{tpu_custom_call.1} parent=31 // pred_region
          %s220 = sand.u32 %s40, 1
          %s221 = scalar_lea.sflag [#allocation5], %s220
          %s222 = sand.u32 %s40, 1
          %s223 = smul.addr %s222, 32
          %s224 = scalar_lea.vmem [#allocation4], %s223
          %s225 = smul.u32 4, %s24
          %s227 = ssub.s32 512, 512
          %228 = vsyncadd %s221, %s227
          %s229 = sadd.s32 %s23, %s225
          %s230 = smul.addr %s229, 128
          %s231 = scalar_lea.hbm %s0, %s230
          %s232 = sshll.u32 %s224, 4
          %s233 = int_to_ptr.vmem [resolvable:$true] %s232
          %238 = dma.hbm_to_vmem [thread:$0]  %s231, 512, %s233, %s221, 128, 128, 8
        $region36: #{tpu_custom_call.1} parent=31 // pred_fallthru
          _
      $region32: #{tpu_custom_call.1} parent=5 // pred_fallthru
        _
      %p239 = scmp.le.s32.totalorder 1, %s16
      %p240 = scmp.lt.s32.totalorder %s16, 4
      %p241 = pnand %p239, %p240
      %p242 = pneg %p241
      // Predicated region
      $region37: #{tpu_custom_call.1} parent=5 // pred_check
        _
      $region38: #{tpu_custom_call.1} parent=5 // pred_check_branch
        %244 = sbr.rel (%p241) target = $region40
      $region39: #{tpu_custom_call.1} parent=5 // pred_region
        %s245 = ssub.s32 %s16, 1
        %s246 = sand.u32 %s43, 1
        %s247 = scalar_lea.sflag [#allocation5], %s246
        %s248 = sand.u32 %s43, 1
        %s249 = smul.addr %s248, 32
        %s250 = scalar_lea.vmem [#allocation4], %s249
        // Predicated region
        $region41: #{tpu_custom_call.1} parent=39 // pred_check
          %p251 = pneg %p56
        $region42: #{tpu_custom_call.1} parent=39 // pred_check_branch
          %253 = sbr.rel (%p251) target = $region44
        $region43: #{tpu_custom_call.1} parent=39 // pred_region
          %254 = dma.done %s247, 512
        $region44: #{tpu_custom_call.1} parent=39 // pred_fallthru
          _
        // Predicated region
        $region45: #{tpu_custom_call.1} parent=39 // pred_check
          %p255 = pneg %p77
        $region46: #{tpu_custom_call.1} parent=39 // pred_check_branch
          %257 = sbr.rel (%p255) target = $region48
        $region47: #{tpu_custom_call.1} parent=39 // pred_region
          %258 = dma.done [#allocation8], 6144
        $region48: #{tpu_custom_call.1} parent=39 // pred_fallthru
          _
        // Predicated region
        $region49: #{tpu_custom_call.1} parent=39 // pred_check
          %p259 = pneg %p98
        $region50: #{tpu_custom_call.1} parent=39 // pred_check_branch
          %261 = sbr.rel (%p259) target = $region52
        $region51: #{tpu_custom_call.1} parent=39 // pred_region
          %262 = dma.done [#allocation8], 6144
        $region52: #{tpu_custom_call.1} parent=39 // pred_fallthru
          _
        %s263 = sand.u32 %s43, 1
        %s264 = scalar_lea.sflag [#allocation5], %s263
        %s265 = sand.u32 %s43, 1
        %s266 = smul.addr %s265, 32
        %s267 = scalar_lea.vmem [#allocation4], %s266
        %p268 = pneg %p56
        %p269 = pneg %p53
        %p270 = pneg %p77
        %p271 = pneg %p74
        %p272 = pneg %p98
        %p273 = pneg %p95
        %p274 = pneg %p119
        %p275 = pneg %p116
        %p276 = pneg %p140
        %p277 = pneg %p137
        %p278 = pneg %p166
        %p279 = pneg %p163
        %s280 = smul.u32 4, %s26
        %p281 = scmp.eq.s32.totalorder %s26, 0
        // Predicated region
        $region53: #{tpu_custom_call.1} parent=39 // pred_check
          %p282 = pneg %p281
        $region54: #{tpu_custom_call.1} parent=39 // pred_check_branch
          %284 = sbr.rel (%p282) target = $region56
        $region55: #{tpu_custom_call.1} parent=39 // pred_region
          %285 = vst [vmem:[#allocation2] sm:$0xff] 0.0
        $region56: #{tpu_custom_call.1} parent=39 // pred_fallthru
          _
        %v286 = vld [vmem:[%s250] sm:$0xff]
        %v287 = vld [vmem:[%s250 + $0x8] sm:$0xff]
        %v288 = vld [vmem:[%s250 + $0x10] sm:$0xff]
        %v289 = vld [vmem:[%s250 + $0x18] sm:$0xff]
        %v290 = vld [vmem:[#allocation7] sm:$0xff]
        %v291 = vld [vmem:[#allocation7 + $0x8] sm:$0xff]
        %v292 = vld [vmem:[#allocation7 + $0x10] sm:$0xff]
        %v293 = vld [vmem:[#allocation7 + $0x18] sm:$0xff]
        %v294 = vld [vmem:[#allocation7 + $0x20] sm:$0xff]
        %v295 = vld [vmem:[#allocation7 + $0x28] sm:$0xff]
        %v296 = vld [vmem:[#allocation7 + $0x30] sm:$0xff]
        %v297 = vld [vmem:[#allocation7 + $0x38] sm:$0xff]
        %v298 = vld [vmem:[#allocation7 + $0x40] sm:$0xff]
        %v299 = vld [vmem:[#allocation7 + $0x48] sm:$0xff]
        %v300 = vld [vmem:[#allocation7 + $0x50] sm:$0xff]
        %v301 = vld [vmem:[#allocation7 + $0x58] sm:$0xff]
        %v302 = vld [vmem:[#allocation7 + $0x60] sm:$0xff]
        %v303 = vld [vmem:[#allocation7 + $0x68] sm:$0xff]
        %v304 = vld [vmem:[#allocation7 + $0x70] sm:$0xff]
        %v305 = vld [vmem:[#allocation7 + $0x78] sm:$0xff]
        %v306 = vld [vmem:[#allocation7 + $0x80] sm:$0xff]
        %v307 = vld [vmem:[#allocation7 + $0x88] sm:$0xff]
        %v308 = vld [vmem:[#allocation7 + $0x90] sm:$0xff]
        %v309 = vld [vmem:[#allocation7 + $0x98] sm:$0xff]
        %v310 = vld [vmem:[#allocation7 + $0xa0] sm:$0xff]
        %v311 = vld [vmem:[#allocation7 + $0xa8] sm:$0xff]
        %v312 = vld [vmem:[#allocation7 + $0xb0] sm:$0xff]
        %v313 = vld [vmem:[#allocation7 + $0xb8] sm:$0xff]
        %v314 = vld [vmem:[#allocation7 + $0xc0] sm:$0xff]
        %v315 = vld [vmem:[#allocation7 + $0xc8] sm:$0xff]
        %v316 = vld [vmem:[#allocation7 + $0xd0] sm:$0xff]
        %v317 = vld [vmem:[#allocation7 + $0xd8] sm:$0xff]
        %v318 = vld [vmem:[#allocation7 + $0xe0] sm:$0xff]
        %v319 = vld [vmem:[#allocation7 + $0xe8] sm:$0xff]
        %v320 = vld [vmem:[#allocation7 + $0xf0] sm:$0xff]
        %v321 = vld [vmem:[#allocation7 + $0xf8] sm:$0xff]
        %v322 = vld [vmem:[#allocation7 + $0x100] sm:$0xff]
        %v323 = vld [vmem:[#allocation7 + $0x108] sm:$0xff]
        %v324 = vld [vmem:[#allocation7 + $0x110] sm:$0xff]
        %v325 = vld [vmem:[#allocation7 + $0x118] sm:$0xff]
        %v326 = vld [vmem:[#allocation7 + $0x120] sm:$0xff]
        %v327 = vld [vmem:[#allocation7 + $0x128] sm:$0xff]
        %v328 = vld [vmem:[#allocation7 + $0x130] sm:$0xff]
        %v329 = vld [vmem:[#allocation7 + $0x138] sm:$0xff]
        %v330 = vld [vmem:[#allocation7 + $0x140] sm:$0xff]
        %v331 = vld [vmem:[#allocation7 + $0x148] sm:$0xff]
        %v332 = vld [vmem:[#allocation7 + $0x150] sm:$0xff]
        %v333 = vld [vmem:[#allocation7 + $0x158] sm:$0xff]
        %v334 = vld [vmem:[#allocation7 + $0x160] sm:$0xff]
        %v335 = vld [vmem:[#allocation7 + $0x168] sm:$0xff]
        %v336 = vld [vmem:[#allocation7 + $0x170] sm:$0xff]
        %v337 = vld [vmem:[#allocation7 + $0x178] sm:$0xff]
        %v338 = vld [vmem:[%s3] sm:$0x7]
        %v340 = vlaneseq
        %v341 = vshrl.u32 %v340, 7
        %v342 = vsub.s32 0, %v341
        %v343 = vrot.slane %v338, %v342
        %v344 = vlaneseq
        %v345 = vshrl.u32 %v344, 7
        %v346 = vsub.s32 1, %v345
        %v347 = vrot.slane %v338, %v346
        %v348 = vlaneseq
        %v349 = vshrl.u32 %v348, 7
        %v350 = vsub.s32 2, %v349
        %v351 = vrot.slane %v338, %v350
        %355 = vmatprep.subr.mxu0 %v291
        %356 = vmatpush1.msra.mxu0 %v290
        %357 = vmatprep.subr.mxu0 %v294
        %358 = vmatpush1.msra.mxu0 %v293
        %359 = vmatprep.subr.mxu0 %v297
        %360 = vmatpush1.msra.mxu0 %v296
        %361 = vmatprep.subr.mxu0 %v300
        %362 = vmatpush1.msra.mxu0 %v299
        %363 = vmatprep.subr.mxu0 %v303
        %364 = vmatpush1.msra.mxu0 %v302
        %365 = vmatprep.subr.mxu0 %v306
        %366 = vmatpush1.msra.mxu0 %v305
        %367 = vmatprep.subr.mxu0 %v309
        %368 = vmatpush1.msra.mxu0 %v308
        %369 = vmatprep.subr.mxu0 %v312
        %370 = vmatpush1.msra.mxu0 %v311
        %371 = vmatprep.subr.mxu0 %v315
        %372 = vmatpush1.msra.mxu0 %v314
        %373 = vmatprep.subr.mxu0 %v318
        %374 = vmatpush1.msra.mxu0 %v317
        %375 = vmatprep.subr.mxu0 %v321
        %376 = vmatpush1.msra.mxu0 %v320
        %377 = vmatprep.subr.mxu0 %v324
        %378 = vmatpush1.msra.mxu0 %v323
        %379 = vmatprep.subr.mxu0 %v327
        %380 = vmatpush1.msra.mxu0 %v326
        %381 = vmatprep.subr.mxu0 %v330
        %382 = vmatpush1.msra.mxu0 %v329
        %383 = vmatprep.subr.mxu0 %v333
        %384 = vmatpush1.msra.mxu0 %v332
        %385 = vmatprep.subr.mxu0 %v336
        %386 = vmatpush1.msra.mxu0 %v335
        %387 = vmatprep.subr.mxu0 0.0
        %388 = vmatpush1.msra.mxu0 0.0
        %389 = vmatprep.subr.mxu0 0.0
        %390 = vmatpush1.msra.mxu0 0.0
        %391 = vmatprep.subr.mxu0 0.0
        %392 = vmatpush1.msra.mxu0 0.0
        %393 = vmatprep.subr.mxu0 0.0
        %394 = vmatpush1.msra.mxu0 0.0
        %395 = vmatprep.subr.mxu0 0.0
        %396 = vmatpush1.msra.mxu0 0.0
        %397 = vmatprep.subr.mxu0 0.0
        %398 = vmatpush1.msra.mxu0 0.0
        %399 = vmatprep.subr.mxu0 0.0
        %400 = vmatpush1.msra.mxu0 0.0
        %401 = vmatprep.subr.mxu0 0.0
        %402 = vmatpush1.msra.mxu0 0.0
        %403 = vmatprep.subr.mxu0 0.0
        %404 = vmatpush1.msra.mxu0 0.0
        %405 = vmatprep.subr.mxu0 0.0
        %406 = vmatpush1.msra.mxu0 0.0
        %407 = vmatprep.subr.mxu0 0.0
        %408 = vmatpush1.msra.mxu0 0.0
        %409 = vmatprep.subr.mxu0 0.0
        %410 = vmatpush1.msra.mxu0 0.0
        %411 = vmatprep.subr.mxu0 0.0
        %412 = vmatpush1.msra.mxu0 0.0
        %413 = vmatprep.subr.mxu0 0.0
        %414 = vmatpush1.msra.mxu0 0.0
        %415 = vmatprep.subr.mxu0 0.0
        %416 = vmatpush1.msra.mxu0 0.0
        %417 = vmatprep.subr.mxu0 0.0
        %418 = vmatpush1.msra.mxu0 0.0
        %419 = vmatprep.mubr.f32.mxu0 0.0
        %420 = vmatmul.mubr.f32.gmra.mrb[0].mxu0 %v286
        %v421 = vpop.f32.mrb[0].mxu0
        %v422 = vadd.f32 %v343, %v421
        %v423 = vpop.f32.mrb[0].mxu0
        %v424 = vadd.f32 %v347, %v423
        %425 = vmatprep.mubr.f32.mxu0 0.0
        %426 = vmatmul.mubr.f32.gmra.mrb[0].mxu0 %v287
        %v427 = vpop.f32.mrb[0].mxu0
        %v428 = vadd.f32 %v343, %v427
        %v429 = vpop.f32.mrb[0].mxu0
        %v430 = vadd.f32 %v347, %v429
        %431 = vmatprep.mubr.f32.mxu0 0.0
        %432 = vmatmul.mubr.f32.gmra.mrb[0].mxu0 %v288
        %v433 = vpop.f32.mrb[0].mxu0
        %v434 = vadd.f32 %v343, %v433
        %v435 = vpop.f32.mrb[0].mxu0
        %v436 = vadd.f32 %v347, %v435
        %437 = vmatprep.mubr.f32.mxu0 0.0
        %438 = vmatmul.mubr.f32.gmra.mrb[0].mxu0 %v289
        %v439 = vpop.f32.mrb[0].mxu0
        %v440 = vadd.f32 %v343, %v439
        %v441 = vpop.f32.mrb[0].mxu0
        %v442 = vadd.f32 %v347, %v441
        %443 = vdwg.mxu0
        %444 = vmatprep.subr.mxu0 0.0
        %445 = vmatpush1.msra.mxu0 %v292
        %446 = vmatprep.subr.mxu0 0.0
        %447 = vmatpush1.msra.mxu0 %v295
        %448 = vmatprep.subr.mxu0 0.0
        %449 = vmatpush1.msra.mxu0 %v298
        %450 = vmatprep.subr.mxu0 0.0
        %451 = vmatpush1.msra.mxu0 %v301
        %452 = vmatprep.subr.mxu0 0.0
        %453 = vmatpush1.msra.mxu0 %v304
        %454 = vmatprep.subr.mxu0 0.0
        %455 = vmatpush1.msra.mxu0 %v307
        %456 = vmatprep.subr.mxu0 0.0
        %457 = vmatpush1.msra.mxu0 %v310
        %458 = vmatprep.subr.mxu0 0.0
        %459 = vmatpush1.msra.mxu0 %v313
        %460 = vmatprep.subr.mxu0 0.0
        %461 = vmatpush1.msra.mxu0 %v316
        %462 = vmatprep.subr.mxu0 0.0
        %463 = vmatpush1.msra.mxu0 %v319
        %464 = vmatprep.subr.mxu0 0.0
        %465 = vmatpush1.msra.mxu0 %v322
        %466 = vmatprep.subr.mxu0 0.0
        %467 = vmatpush1.msra.mxu0 %v325
        %468 = vmatprep.subr.mxu0 0.0
        %469 = vmatpush1.msra.mxu0 %v328
        %470 = vmatprep.subr.mxu0 0.0
        %471 = vmatpush1.msra.mxu0 %v331
        %472 = vmatprep.subr.mxu0 0.0
        %473 = vmatpush1.msra.mxu0 %v334
        %474 = vmatprep.subr.mxu0 0.0
        %475 = vmatpush1.msra.mxu0 %v337
        %476 = vmatprep.subr.mxu0 0.0
        %477 = vmatpush1.msra.mxu0 0.0
        %478 = vmatprep.subr.mxu0 0.0
        %479 = vmatpush1.msra.mxu0 0.0
        %480 = vmatprep.subr.mxu0 0.0
        %481 = vmatpush1.msra.mxu0 0.0
        %482 = vmatprep.subr.mxu0 0.0
        %483 = vmatpush1.msra.mxu0 0.0
        %484 = vmatprep.subr.mxu0 0.0
        %485 = vmatpush1.msra.mxu0 0.0
        %486 = vmatprep.subr.mxu0 0.0
        %487 = vmatpush1.msra.mxu0 0.0
        %488 = vmatprep.subr.mxu0 0.0
        %489 = vmatpush1.msra.mxu0 0.0
        %490 = vmatprep.subr.mxu0 0.0
        %491 = vmatpush1.msra.mxu0 0.0
        %492 = vmatprep.subr.mxu0 0.0
        %493 = vmatpush1.msra.mxu0 0.0
        %494 = vmatprep.subr.mxu0 0.0
        %495 = vmatpush1.msra.mxu0 0.0
        %496 = vmatprep.subr.mxu0 0.0
        %497 = vmatpush1.msra.mxu0 0.0
        %498 = vmatprep.subr.mxu0 0.0
        %499 = vmatpush1.msra.mxu0 0.0
        %500 = vmatprep.subr.mxu0 0.0
        %501 = vmatpush1.msra.mxu0 0.0
        %502 = vmatprep.subr.mxu0 0.0
        %503 = vmatpush1.msra.mxu0 0.0
        %504 = vmatprep.subr.mxu0 0.0
        %505 = vmatpush1.msra.mxu0 0.0
        %506 = vmatprep.subr.mxu0 0.0
        %507 = vmatpush1.msra.mxu0 0.0
        %508 = vmatprep.mubr.f32.mxu0 0.0
        %509 = vmatmul.mubr.f32.gmra.mrb[0].mxu0 %v286
        %v510 = vpop.f32.mrb[0].mxu0
        %v511 = vadd.f32 %v351, %v510
        %v512 = vpop.f32.mrb[0].mxu0
        %513 = vmatprep.mubr.f32.mxu0 0.0
        %514 = vmatmul.mubr.f32.gmra.mrb[0].mxu0 %v287
        %v515 = vpop.f32.mrb[0].mxu0
        %v516 = vadd.f32 %v351, %v515
        %v517 = vpop.f32.mrb[0].mxu0
        %518 = vmatprep.mubr.f32.mxu0 0.0
        %519 = vmatmul.mubr.f32.gmra.mrb[0].mxu0 %v288
        %v520 = vpop.f32.mrb[0].mxu0
        %v521 = vadd.f32 %v351, %v520
        %v522 = vpop.f32.mrb[0].mxu0
        %523 = vmatprep.mubr.f32.mxu0 0.0
        %524 = vmatmul.mubr.f32.gmra.mrb[0].mxu0 %v289
        %v525 = vpop.f32.mrb[0].mxu0
        %v526 = vadd.f32 %v351, %v525
        %v527 = vpop.f32.mrb[0].mxu0
        %528 = vdwg.mxu0
        %529 = vst [vmem:[#allocation3] sm:$0xff] %v422
        %530 = vst [vmem:[#allocation3 + $0x8] sm:$0xff] %v424
        %531 = vst [vmem:[#allocation3 + $0x10] sm:$0xff] %v511
        %532 = vst [vmem:[#allocation3 + $0x18] sm:$0xff] %v428
        %533 = vst [vmem:[#allocation3 + $0x20] sm:$0xff] %v430
        %534 = vst [vmem:[#allocation3 + $0x28] sm:$0xff] %v516
        %535 = vst [vmem:[#allocation3 + $0x30] sm:$0xff] %v434
        %536 = vst [vmem:[#allocation3 + $0x38] sm:$0xff] %v436
        %537 = vst [vmem:[#allocation3 + $0x40] sm:$0xff] %v521
        %538 = vst [vmem:[#allocation3 + $0x48] sm:$0xff] %v440
        %539 = vst [vmem:[#allocation3 + $0x50] sm:$0xff] %v442
        %540 = vst [vmem:[#allocation3 + $0x58] sm:$0xff] %v526
        %v541 = vld [vmem:[#allocation9] sm:$0xff]
        %v542 = vld [vmem:[#allocation9 + $0x8] sm:$0xff]
        %v543 = vld [vmem:[#allocation9 + $0x10] sm:$0xff]
        %v544 = vld [vmem:[#allocation9 + $0x18] sm:$0xff]
        %v545 = vld [vmem:[#allocation9 + $0x20] sm:$0xff]
        %v546 = vld [vmem:[#allocation9 + $0x28] sm:$0xff]
        %v547 = vld [vmem:[#allocation9 + $0x30] sm:$0xff]
        %v548 = vld [vmem:[#allocation9 + $0x38] sm:$0xff]
        %v549 = vld [vmem:[#allocation9 + $0x40] sm:$0xff]
        %v550 = vld [vmem:[#allocation9 + $0x48] sm:$0xff]
        %v551 = vld [vmem:[#allocation9 + $0x50] sm:$0xff]
        %v552 = vld [vmem:[#allocation9 + $0x58] sm:$0xff]
        %v553 = vld [vmem:[#allocation9 + $0x60] sm:$0xff]
        %v554 = vld [vmem:[#allocation9 + $0x68] sm:$0xff]
        %v555 = vld [vmem:[#allocation9 + $0x70] sm:$0xff]
        %v556 = vld [vmem:[#allocation9 + $0x78] sm:$0xff]
        %v557 = vld [vmem:[#allocation9 + $0x80] sm:$0xff]
        %v558 = vld [vmem:[#allocation9 + $0x88] sm:$0xff]
        %v559 = vld [vmem:[#allocation9 + $0x90] sm:$0xff]
        %v560 = vld [vmem:[#allocation9 + $0x98] sm:$0xff]
        %v561 = vld [vmem:[#allocation9 + $0xa0] sm:$0xff]
        %v562 = vld [vmem:[#allocation9 + $0xa8] sm:$0xff]
        %v563 = vld [vmem:[#allocation9 + $0xb0] sm:$0xff]
        %v564 = vld [vmem:[#allocation9 + $0xb8] sm:$0xff]
        %v565 = vld [vmem:[#allocation9 + $0xc0] sm:$0xff]
        %v566 = vld [vmem:[#allocation9 + $0xc8] sm:$0xff]
        %v567 = vld [vmem:[#allocation9 + $0xd0] sm:$0xff]
        %v568 = vld [vmem:[#allocation9 + $0xd8] sm:$0xff]
        %v569 = vld [vmem:[#allocation9 + $0xe0] sm:$0xff]
        %v570 = vld [vmem:[#allocation9 + $0xe8] sm:$0xff]
        %v571 = vld [vmem:[#allocation9 + $0xf0] sm:$0xff]
        %v572 = vld [vmem:[#allocation9 + $0xf8] sm:$0xff]
        %v573 = vld [vmem:[#allocation9 + $0x100] sm:$0xff]
        %v574 = vld [vmem:[#allocation9 + $0x108] sm:$0xff]
        %v575 = vld [vmem:[#allocation9 + $0x110] sm:$0xff]
        %v576 = vld [vmem:[#allocation9 + $0x118] sm:$0xff]
        %v577 = vld [vmem:[#allocation9 + $0x120] sm:$0xff]
        %v578 = vld [vmem:[#allocation9 + $0x128] sm:$0xff]
        %v579 = vld [vmem:[#allocation9 + $0x130] sm:$0xff]
        %v580 = vld [vmem:[#allocation9 + $0x138] sm:$0xff]
        %v581 = vld [vmem:[#allocation9 + $0x140] sm:$0xff]
        %v582 = vld [vmem:[#allocation9 + $0x148] sm:$0xff]
        %v583 = vld [vmem:[#allocation9 + $0x150] sm:$0xff]
        %v584 = vld [vmem:[#allocation9 + $0x158] sm:$0xff]
        %v585 = vld [vmem:[#allocation9 + $0x160] sm:$0xff]
        %v586 = vld [vmem:[#allocation9 + $0x168] sm:$0xff]
        %v587 = vld [vmem:[#allocation9 + $0x170] sm:$0xff]
        %v588 = vld [vmem:[#allocation9 + $0x178] sm:$0xff]
        %v589 = vld [vmem:[%s4] sm:$0x7]
        %v590 = vld [vmem:[#allocation2] sm:$0xff]
        %s591 = smul.u32 0, 3
        %s592 = smul.addr %s591, 8
        %s593 = scalar_lea.vmem [#allocation3], %s592
        %v594 = vld [vmem:[%s593] sm:$0xff]
        %v595 = vld [vmem:[%s593 + $0x8] sm:$0xff]
        %v596 = vld [vmem:[%s593 + $0x10] sm:$0xff]
        %v598 = vlaneseq
        %v599 = vshrl.u32 %v598, 7
        %v600 = vsub.s32 0, %v599
        %v601 = vrot.slane %v589, %v600
        %v602 = vlaneseq
        %v603 = vshrl.u32 %v602, 7
        %v604 = vsub.s32 1, %v603
        %v605 = vrot.slane %v589, %v604
        %v606 = vlaneseq
        %v607 = vshrl.u32 %v606, 7
        %v608 = vsub.s32 2, %v607
        %v609 = vrot.slane %v589, %v608
        %613 = vmatprep.subr.mxu0 %v542
        %614 = vmatpush1.msra.mxu0 %v541
        %615 = vmatprep.subr.mxu0 %v545
        %616 = vmatpush1.msra.mxu0 %v544
        %617 = vmatprep.subr.mxu0 %v548
        %618 = vmatpush1.msra.mxu0 %v547
        %619 = vmatprep.subr.mxu0 %v551
        %620 = vmatpush1.msra.mxu0 %v550
        %621 = vmatprep.subr.mxu0 %v554
        %622 = vmatpush1.msra.mxu0 %v553
        %623 = vmatprep.subr.mxu0 %v557
        %624 = vmatpush1.msra.mxu0 %v556
        %625 = vmatprep.subr.mxu0 %v560
        %626 = vmatpush1.msra.mxu0 %v559
        %627 = vmatprep.subr.mxu0 %v563
        %628 = vmatpush1.msra.mxu0 %v562
        %629 = vmatprep.subr.mxu0 %v566
        %630 = vmatpush1.msra.mxu0 %v565
        %631 = vmatprep.subr.mxu0 %v569
        %632 = vmatpush1.msra.mxu0 %v568
        %633 = vmatprep.subr.mxu0 %v572
        %634 = vmatpush1.msra.mxu0 %v571
        %635 = vmatprep.subr.mxu0 %v575
        %636 = vmatpush1.msra.mxu0 %v574
        %637 = vmatprep.subr.mxu0 %v578
        %638 = vmatpush1.msra.mxu0 %v577
        %639 = vmatprep.subr.mxu0 %v581
        %640 = vmatpush1.msra.mxu0 %v580
        %641 = vmatprep.subr.mxu0 %v584
        %642 = vmatpush1.msra.mxu0 %v583
        %643 = vmatprep.subr.mxu0 %v587
        %644 = vmatpush1.msra.mxu0 %v586
        %645 = vmatprep.subr.mxu0 0.0
        %646 = vmatpush1.msra.mxu0 0.0
        %647 = vmatprep.subr.mxu0 0.0
        %648 = vmatpush1.msra.mxu0 0.0
        %649 = vmatprep.subr.mxu0 0.0
        %650 = vmatpush1.msra.mxu0 0.0
        %651 = vmatprep.subr.mxu0 0.0
        %652 = vmatpush1.msra.mxu0 0.0
        %653 = vmatprep.subr.mxu0 0.0
        %654 = vmatpush1.msra.mxu0 0.0
        %655 = vmatprep.subr.mxu0 0.0
        %656 = vmatpush1.msra.mxu0 0.0
        %657 = vmatprep.subr.mxu0 0.0
        %658 = vmatpush1.msra.mxu0 0.0
        %659 = vmatprep.subr.mxu0 0.0
        %660 = vmatpush1.msra.mxu0 0.0
        %661 = vmatprep.subr.mxu0 0.0
        %662 = vmatpush1.msra.mxu0 0.0
        %663 = vmatprep.subr.mxu0 0.0
        %664 = vmatpush1.msra.mxu0 0.0
        %665 = vmatprep.subr.mxu0 0.0
        %666 = vmatpush1.msra.mxu0 0.0
        %667 = vmatprep.subr.mxu0 0.0
        %668 = vmatpush1.msra.mxu0 0.0
        %669 = vmatprep.subr.mxu0 0.0
        %670 = vmatpush1.msra.mxu0 0.0
        %671 = vmatprep.subr.mxu0 0.0
        %672 = vmatpush1.msra.mxu0 0.0
        %673 = vmatprep.subr.mxu0 0.0
        %674 = vmatpush1.msra.mxu0 0.0
        %675 = vmatprep.subr.mxu0 0.0
        %676 = vmatpush1.msra.mxu0 0.0
        %677 = vmatprep.mubr.f32.mxu0 0.0
        %678 = vmatmul.mubr.f32.gmra.mrb[0].mxu0 %v590
        %v679 = vpop.f32.mrb[0].mxu0
        %v680 = vadd.f32 %v601, %v679
        %v681 = vpop.f32.mrb[0].mxu0
        %v682 = vadd.f32 %v605, %v681
        %683 = vdwg.mxu0
        %684 = vmatprep.subr.mxu0 0.0
        %685 = vmatpush1.msra.mxu0 %v543
        %686 = vmatprep.subr.mxu0 0.0
        %687 = vmatpush1.msra.mxu0 %v546
        %688 = vmatprep.subr.mxu0 0.0
        %689 = vmatpush1.msra.mxu0 %v549
        %690 = vmatprep.subr.mxu0 0.0
        %691 = vmatpush1.msra.mxu0 %v552
        %692 = vmatprep.subr.mxu0 0.0
        %693 = vmatpush1.msra.mxu0 %v555
        %694 = vmatprep.subr.mxu0 0.0
        %695 = vmatpush1.msra.mxu0 %v558
        %696 = vmatprep.subr.mxu0 0.0
        %697 = vmatpush1.msra.mxu0 %v561
        %698 = vmatprep.subr.mxu0 0.0
        %699 = vmatpush1.msra.mxu0 %v564
        %700 = vmatprep.subr.mxu0 0.0
        %701 = vmatpush1.msra.mxu0 %v567
        %702 = vmatprep.subr.mxu0 0.0
        %703 = vmatpush1.msra.mxu0 %v570
        %704 = vmatprep.subr.mxu0 0.0
        %705 = vmatpush1.msra.mxu0 %v573
        %706 = vmatprep.subr.mxu0 0.0
        %707 = vmatpush1.msra.mxu0 %v576
        %708 = vmatprep.subr.mxu0 0.0
        %709 = vmatpush1.msra.mxu0 %v579
        %710 = vmatprep.subr.mxu0 0.0
        %711 = vmatpush1.msra.mxu0 %v582
        %712 = vmatprep.subr.mxu0 0.0
        %713 = vmatpush1.msra.mxu0 %v585
        %714 = vmatprep.subr.mxu0 0.0
        %715 = vmatpush1.msra.mxu0 %v588
        %716 = vmatprep.subr.mxu0 0.0
        %717 = vmatpush1.msra.mxu0 0.0
        %718 = vmatprep.subr.mxu0 0.0
        %719 = vmatpush1.msra.mxu0 0.0
        %720 = vmatprep.subr.mxu0 0.0
        %721 = vmatpush1.msra.mxu0 0.0
        %722 = vmatprep.subr.mxu0 0.0
        %723 = vmatpush1.msra.mxu0 0.0
        %724 = vmatprep.subr.mxu0 0.0
        %725 = vmatpush1.msra.mxu0 0.0
        %726 = vmatprep.subr.mxu0 0.0
        %727 = vmatpush1.msra.mxu0 0.0
        %728 = vmatprep.subr.mxu0 0.0
        %729 = vmatpush1.msra.mxu0 0.0
        %730 = vmatprep.subr.mxu0 0.0
        %731 = vmatpush1.msra.mxu0 0.0
        %732 = vmatprep.subr.mxu0 0.0
        %733 = vmatpush1.msra.mxu0 0.0
        %734 = vmatprep.subr.mxu0 0.0
        %735 = vmatpush1.msra.mxu0 0.0
        %736 = vmatprep.subr.mxu0 0.0
        %737 = vmatpush1.msra.mxu0 0.0
        %738 = vmatprep.subr.mxu0 0.0
        %739 = vmatpush1.msra.mxu0 0.0
        %740 = vmatprep.subr.mxu0 0.0
        %741 = vmatpush1.msra.mxu0 0.0
        %742 = vmatprep.subr.mxu0 0.0
        %743 = vmatpush1.msra.mxu0 0.0
        %744 = vmatprep.subr.mxu0 0.0
        %745 = vmatpush1.msra.mxu0 0.0
        %746 = vmatprep.subr.mxu0 0.0
        %747 = vmatpush1.msra.mxu0 0.0
        %748 = vmatprep.mubr.f32.mxu0 0.0
        %749 = vmatmul.mubr.f32.gmra.mrb[0].mxu0 %v590
        %v750 = vpop.f32.mrb[0].mxu0
        %v751 = vadd.f32 %v609, %v750
        %v752 = vpop.f32.mrb[0].mxu0
        %753 = vdwg.mxu0
        %v754 = vadd.f32 %v594, %v680
        %v755 = vxor.u32 %v754, 2147483648
        %v756 = vmul.f32 %v755, 1.442695
        %v757 = vpow.pop %v756
        %v758 = vadd.f32 %v757, 1.0
        %v759 = vrcp.pop %v758
        %v760 = vmul.f32 1.0, %v759
        %v761 = vadd.f32 %v595, %v682
        %v762 = vxor.u32 %v761, 2147483648
        %v763 = vmul.f32 %v762, 1.442695
        %v764 = vpow.pop %v763
        %v765 = vadd.f32 %v764, 1.0
        %v766 = vrcp.pop %v765
        %v767 = vmul.f32 1.0, %v766
        %v768 = vmul.f32 %v760, %v751
        %v769 = vadd.f32 %v596, %v768
        %v770 = vtanh.pop %v769
        %v771 = vsub.f32 1.0, %v767
        %v772 = vmul.f32 %v771, %v770
        %v773 = vmul.f32 %v767, %v590
        %v774 = vadd.f32 %v772, %v773
        %s775 = smul.u32 %s26, 4
        %p776 = scmp.lt.s32.totalorder %s775, 10
        %s777 = scalar_select %p776, 1, 0
        %v778 = vstv %s777
        %vm779 = vcmp.eq.s32.totalorder %v778, 1
        %v780 = vsel %vm779, %v774, %v590
        %s781 = smul.u32 1, 3
        %s782 = smul.addr %s781, 8
        %s783 = scalar_lea.vmem [#allocation3], %s782
        %v784 = vld [vmem:[%s783] sm:$0xff]
        %v785 = vld [vmem:[%s783 + $0x8] sm:$0xff]
        %v786 = vld [vmem:[%s783 + $0x10] sm:$0xff]
        %787 = vmatprep.subr.mxu0 %v542
        %788 = vmatpush1.msra.mxu0 %v541
        %789 = vmatprep.subr.mxu0 %v545
        %790 = vmatpush1.msra.mxu0 %v544
        %791 = vmatprep.subr.mxu0 %v548
        %792 = vmatpush1.msra.mxu0 %v547
        %793 = vmatprep.subr.mxu0 %v551
        %794 = vmatpush1.msra.mxu0 %v550
        %795 = vmatprep.subr.mxu0 %v554
        %796 = vmatpush1.msra.mxu0 %v553
        %797 = vmatprep.subr.mxu0 %v557
        %798 = vmatpush1.msra.mxu0 %v556
        %799 = vmatprep.subr.mxu0 %v560
        %800 = vmatpush1.msra.mxu0 %v559
        %801 = vmatprep.subr.mxu0 %v563
        %802 = vmatpush1.msra.mxu0 %v562
        %803 = vmatprep.subr.mxu0 %v566
        %804 = vmatpush1.msra.mxu0 %v565
        %805 = vmatprep.subr.mxu0 %v569
        %806 = vmatpush1.msra.mxu0 %v568
        %807 = vmatprep.subr.mxu0 %v572
        %808 = vmatpush1.msra.mxu0 %v571
        %809 = vmatprep.subr.mxu0 %v575
        %810 = vmatpush1.msra.mxu0 %v574
        %811 = vmatprep.subr.mxu0 %v578
        %812 = vmatpush1.msra.mxu0 %v577
        %813 = vmatprep.subr.mxu0 %v581
        %814 = vmatpush1.msra.mxu0 %v580
        %815 = vmatprep.subr.mxu0 %v584
        %816 = vmatpush1.msra.mxu0 %v583
        %817 = vmatprep.subr.mxu0 %v587
        %818 = vmatpush1.msra.mxu0 %v586
        %819 = vmatprep.subr.mxu0 0.0
        %820 = vmatpush1.msra.mxu0 0.0
        %821 = vmatprep.subr.mxu0 0.0
        %822 = vmatpush1.msra.mxu0 0.0
        %823 = vmatprep.subr.mxu0 0.0
        %824 = vmatpush1.msra.mxu0 0.0
        %825 = vmatprep.subr.mxu0 0.0
        %826 = vmatpush1.msra.mxu0 0.0
        %827 = vmatprep.subr.mxu0 0.0
        %828 = vmatpush1.msra.mxu0 0.0
        %829 = vmatprep.subr.mxu0 0.0
        %830 = vmatpush1.msra.mxu0 0.0
        %831 = vmatprep.subr.mxu0 0.0
        %832 = vmatpush1.msra.mxu0 0.0
        %833 = vmatprep.subr.mxu0 0.0
        %834 = vmatpush1.msra.mxu0 0.0
        %835 = vmatprep.subr.mxu0 0.0
        %836 = vmatpush1.msra.mxu0 0.0
        %837 = vmatprep.subr.mxu0 0.0
        %838 = vmatpush1.msra.mxu0 0.0
        %839 = vmatprep.subr.mxu0 0.0
        %840 = vmatpush1.msra.mxu0 0.0
        %841 = vmatprep.subr.mxu0 0.0
        %842 = vmatpush1.msra.mxu0 0.0
        %843 = vmatprep.subr.mxu0 0.0
        %844 = vmatpush1.msra.mxu0 0.0
        %845 = vmatprep.subr.mxu0 0.0
        %846 = vmatpush1.msra.mxu0 0.0
        %847 = vmatprep.subr.mxu0 0.0
        %848 = vmatpush1.msra.mxu0 0.0
        %849 = vmatprep.subr.mxu0 0.0
        %850 = vmatpush1.msra.mxu0 0.0
        %851 = vmatprep.mubr.f32.mxu0 0.0
        %852 = vmatmul.mubr.f32.gmra.mrb[0].mxu0 %v780
        %v853 = vpop.f32.mrb[0].mxu0
        %v854 = vadd.f32 %v601, %v853
        %v855 = vpop.f32.mrb[0].mxu0
        %v856 = vadd.f32 %v605, %v855
        %857 = vdwg.mxu0
        %858 = vmatprep.subr.mxu0 0.0
        %859 = vmatpush1.msra.mxu0 %v543
        %860 = vmatprep.subr.mxu0 0.0
        %861 = vmatpush1.msra.mxu0 %v546
        %862 = vmatprep.subr.mxu0 0.0
        %863 = vmatpush1.msra.mxu0 %v549
        %864 = vmatprep.subr.mxu0 0.0
        %865 = vmatpush1.msra.mxu0 %v552
        %866 = vmatprep.subr.mxu0 0.0
        %867 = vmatpush1.msra.mxu0 %v555
        %868 = vmatprep.subr.mxu0 0.0
        %869 = vmatpush1.msra.mxu0 %v558
        %870 = vmatprep.subr.mxu0 0.0
        %871 = vmatpush1.msra.mxu0 %v561
        %872 = vmatprep.subr.mxu0 0.0
        %873 = vmatpush1.msra.mxu0 %v564
        %874 = vmatprep.subr.mxu0 0.0
        %875 = vmatpush1.msra.mxu0 %v567
        %876 = vmatprep.subr.mxu0 0.0
        %877 = vmatpush1.msra.mxu0 %v570
        %878 = vmatprep.subr.mxu0 0.0
        %879 = vmatpush1.msra.mxu0 %v573
        %880 = vmatprep.subr.mxu0 0.0
        %881 = vmatpush1.msra.mxu0 %v576
        %882 = vmatprep.subr.mxu0 0.0
        %883 = vmatpush1.msra.mxu0 %v579
        %884 = vmatprep.subr.mxu0 0.0
        %885 = vmatpush1.msra.mxu0 %v582
        %886 = vmatprep.subr.mxu0 0.0
        %887 = vmatpush1.msra.mxu0 %v585
        %888 = vmatprep.subr.mxu0 0.0
        %889 = vmatpush1.msra.mxu0 %v588
        %890 = vmatprep.subr.mxu0 0.0
        %891 = vmatpush1.msra.mxu0 0.0
        %892 = vmatprep.subr.mxu0 0.0
        %893 = vmatpush1.msra.mxu0 0.0
        %894 = vmatprep.subr.mxu0 0.0
        %895 = vmatpush1.msra.mxu0 0.0
        %896 = vmatprep.subr.mxu0 0.0
        %897 = vmatpush1.msra.mxu0 0.0
        %898 = vmatprep.subr.mxu0 0.0
        %899 = vmatpush1.msra.mxu0 0.0
        %900 = vmatprep.subr.mxu0 0.0
        %901 = vmatpush1.msra.mxu0 0.0
        %902 = vmatprep.subr.mxu0 0.0
        %903 = vmatpush1.msra.mxu0 0.0
        %904 = vmatprep.subr.mxu0 0.0
        %905 = vmatpush1.msra.mxu0 0.0
        %906 = vmatprep.subr.mxu0 0.0
        %907 = vmatpush1.msra.mxu0 0.0
        %908 = vmatprep.subr.mxu0 0.0
        %909 = vmatpush1.msra.mxu0 0.0
        %910 = vmatprep.subr.mxu0 0.0
        %911 = vmatpush1.msra.mxu0 0.0
        %912 = vmatprep.subr.mxu0 0.0
        %913 = vmatpush1.msra.mxu0 0.0
        %914 = vmatprep.subr.mxu0 0.0
        %915 = vmatpush1.msra.mxu0 0.0
        %916 = vmatprep.subr.mxu0 0.0
        %917 = vmatpush1.msra.mxu0 0.0
        %918 = vmatprep.subr.mxu0 0.0
        %919 = vmatpush1.msra.mxu0 0.0
        %920 = vmatprep.subr.mxu0 0.0
        %921 = vmatpush1.msra.mxu0 0.0
        %922 = vmatprep.mubr.f32.mxu0 0.0
        %923 = vmatmul.mubr.f32.gmra.mrb[0].mxu0 %v780
        %v924 = vpop.f32.mrb[0].mxu0
        %v925 = vadd.f32 %v609, %v924
        %v926 = vpop.f32.mrb[0].mxu0
        %927 = vdwg.mxu0
        %v928 = vadd.f32 %v784, %v854
        %v929 = vxor.u32 %v928, 2147483648
        %v930 = vmul.f32 %v929, 1.442695
        %v931 = vpow.pop %v930
        %v932 = vadd.f32 %v931, 1.0
        %v933 = vrcp.pop %v932
        %v934 = vmul.f32 1.0, %v933
        %v935 = vadd.f32 %v785, %v856
        %v936 = vxor.u32 %v935, 2147483648
        %v937 = vmul.f32 %v936, 1.442695
        %v938 = vpow.pop %v937
        %v939 = vadd.f32 %v938, 1.0
        %v940 = vrcp.pop %v939
        %v941 = vmul.f32 1.0, %v940
        %v942 = vmul.f32 %v934, %v925
        %v943 = vadd.f32 %v786, %v942
        %v944 = vtanh.pop %v943
        %v945 = vsub.f32 1.0, %v941
        %v946 = vmul.f32 %v945, %v944
        %v947 = vmul.f32 %v941, %v780
        %v948 = vadd.f32 %v946, %v947
        %s949 = sadd.s32 %s775, 1
        %p950 = scmp.lt.s32.totalorder %s949, 10
        %s951 = scalar_select %p950, 1, 0
        %v952 = vstv %s951
        %vm953 = vcmp.eq.s32.totalorder %v952, 1
        %v954 = vsel %vm953, %v948, %v780
        %s955 = smul.u32 2, 3
        %s956 = smul.addr %s955, 8
        %s957 = scalar_lea.vmem [#allocation3], %s956
        %v958 = vld [vmem:[%s957] sm:$0xff]
        %v959 = vld [vmem:[%s957 + $0x8] sm:$0xff]
        %v960 = vld [vmem:[%s957 + $0x10] sm:$0xff]
        %961 = vmatprep.subr.mxu0 %v542
        %962 = vmatpush1.msra.mxu0 %v541
        %963 = vmatprep.subr.mxu0 %v545
        %964 = vmatpush1.msra.mxu0 %v544
        %965 = vmatprep.subr.mxu0 %v548
        %966 = vmatpush1.msra.mxu0 %v547
        %967 = vmatprep.subr.mxu0 %v551
        %968 = vmatpush1.msra.mxu0 %v550
        %969 = vmatprep.subr.mxu0 %v554
        %970 = vmatpush1.msra.mxu0 %v553
        %971 = vmatprep.subr.mxu0 %v557
        %972 = vmatpush1.msra.mxu0 %v556
        %973 = vmatprep.subr.mxu0 %v560
        %974 = vmatpush1.msra.mxu0 %v559
        %975 = vmatprep.subr.mxu0 %v563
        %976 = vmatpush1.msra.mxu0 %v562
        %977 = vmatprep.subr.mxu0 %v566
        %978 = vmatpush1.msra.mxu0 %v565
        %979 = vmatprep.subr.mxu0 %v569
        %980 = vmatpush1.msra.mxu0 %v568
        %981 = vmatprep.subr.mxu0 %v572
        %982 = vmatpush1.msra.mxu0 %v571
        %983 = vmatprep.subr.mxu0 %v575
        %984 = vmatpush1.msra.mxu0 %v574
        %985 = vmatprep.subr.mxu0 %v578
        %986 = vmatpush1.msra.mxu0 %v577
        %987 = vmatprep.subr.mxu0 %v581
        %988 = vmatpush1.msra.mxu0 %v580
        %989 = vmatprep.subr.mxu0 %v584
        %990 = vmatpush1.msra.mxu0 %v583
        %991 = vmatprep.subr.mxu0 %v587
        %992 = vmatpush1.msra.mxu0 %v586
        %993 = vmatprep.subr.mxu0 0.0
        %994 = vmatpush1.msra.mxu0 0.0
        %995 = vmatprep.subr.mxu0 0.0
        %996 = vmatpush1.msra.mxu0 0.0
        %997 = vmatprep.subr.mxu0 0.0
        %998 = vmatpush1.msra.mxu0 0.0
        %999 = vmatprep.subr.mxu0 0.0
        %1000 = vmatpush1.msra.mxu0 0.0
        %1001 = vmatprep.subr.mxu0 0.0
        %1002 = vmatpush1.msra.mxu0 0.0
        %1003 = vmatprep.subr.mxu0 0.0
        %1004 = vmatpush1.msra.mxu0 0.0
        %1005 = vmatprep.subr.mxu0 0.0
        %1006 = vmatpush1.msra.mxu0 0.0
        %1007 = vmatprep.subr.mxu0 0.0
        %1008 = vmatpush1.msra.mxu0 0.0
        %1009 = vmatprep.subr.mxu0 0.0
        %1010 = vmatpush1.msra.mxu0 0.0
        %1011 = vmatprep.subr.mxu0 0.0
        %1012 = vmatpush1.msra.mxu0 0.0
        %1013 = vmatprep.subr.mxu0 0.0
        %1014 = vmatpush1.msra.mxu0 0.0
        %1015 = vmatprep.subr.mxu0 0.0
        %1016 = vmatpush1.msra.mxu0 0.0
        %1017 = vmatprep.subr.mxu0 0.0
        %1018 = vmatpush1.msra.mxu0 0.0
        %1019 = vmatprep.subr.mxu0 0.0
        %1020 = vmatpush1.msra.mxu0 0.0
        %1021 = vmatprep.subr.mxu0 0.0
        %1022 = vmatpush1.msra.mxu0 0.0
        %1023 = vmatprep.subr.mxu0 0.0
        %1024 = vmatpush1.msra.mxu0 0.0
        %1025 = vmatprep.mubr.f32.mxu0 0.0
        %1026 = vmatmul.mubr.f32.gmra.mrb[0].mxu0 %v954
        %v1027 = vpop.f32.mrb[0].mxu0
        %v1028 = vadd.f32 %v601, %v1027
        %v1029 = vpop.f32.mrb[0].mxu0
        %v1030 = vadd.f32 %v605, %v1029
        %1031 = vdwg.mxu0
        %1032 = vmatprep.subr.mxu0 0.0
        %1033 = vmatpush1.msra.mxu0 %v543
        %1034 = vmatprep.subr.mxu0 0.0
        %1035 = vmatpush1.msra.mxu0 %v546
        %1036 = vmatprep.subr.mxu0 0.0
        %1037 = vmatpush1.msra.mxu0 %v549
        %1038 = vmatprep.subr.mxu0 0.0
        %1039 = vmatpush1.msra.mxu0 %v552
        %1040 = vmatprep.subr.mxu0 0.0
        %1041 = vmatpush1.msra.mxu0 %v555
        %1042 = vmatprep.subr.mxu0 0.0
        %1043 = vmatpush1.msra.mxu0 %v558
        %1044 = vmatprep.subr.mxu0 0.0
        %1045 = vmatpush1.msra.mxu0 %v561
        %1046 = vmatprep.subr.mxu0 0.0
        %1047 = vmatpush1.msra.mxu0 %v564
        %1048 = vmatprep.subr.mxu0 0.0
        %1049 = vmatpush1.msra.mxu0 %v567
        %1050 = vmatprep.subr.mxu0 0.0
        %1051 = vmatpush1.msra.mxu0 %v570
        %1052 = vmatprep.subr.mxu0 0.0
        %1053 = vmatpush1.msra.mxu0 %v573
        %1054 = vmatprep.subr.mxu0 0.0
        %1055 = vmatpush1.msra.mxu0 %v576
        %1056 = vmatprep.subr.mxu0 0.0
        %1057 = vmatpush1.msra.mxu0 %v579
        %1058 = vmatprep.subr.mxu0 0.0
        %1059 = vmatpush1.msra.mxu0 %v582
        %1060 = vmatprep.subr.mxu0 0.0
        %1061 = vmatpush1.msra.mxu0 %v585
        %1062 = vmatprep.subr.mxu0 0.0
        %1063 = vmatpush1.msra.mxu0 %v588
        %1064 = vmatprep.subr.mxu0 0.0
        %1065 = vmatpush1.msra.mxu0 0.0
        %1066 = vmatprep.subr.mxu0 0.0
        %1067 = vmatpush1.msra.mxu0 0.0
        %1068 = vmatprep.subr.mxu0 0.0
        %1069 = vmatpush1.msra.mxu0 0.0
        %1070 = vmatprep.subr.mxu0 0.0
        %1071 = vmatpush1.msra.mxu0 0.0
        %1072 = vmatprep.subr.mxu0 0.0
        %1073 = vmatpush1.msra.mxu0 0.0
        %1074 = vmatprep.subr.mxu0 0.0
        %1075 = vmatpush1.msra.mxu0 0.0
        %1076 = vmatprep.subr.mxu0 0.0
        %1077 = vmatpush1.msra.mxu0 0.0
        %1078 = vmatprep.subr.mxu0 0.0
        %1079 = vmatpush1.msra.mxu0 0.0
        %1080 = vmatprep.subr.mxu0 0.0
        %1081 = vmatpush1.msra.mxu0 0.0
        %1082 = vmatprep.subr.mxu0 0.0
        %1083 = vmatpush1.msra.mxu0 0.0
        %1084 = vmatprep.subr.mxu0 0.0
        %1085 = vmatpush1.msra.mxu0 0.0
        %1086 = vmatprep.subr.mxu0 0.0
        %1087 = vmatpush1.msra.mxu0 0.0
        %1088 = vmatprep.subr.mxu0 0.0
        %1089 = vmatpush1.msra.mxu0 0.0
        %1090 = vmatprep.subr.mxu0 0.0
        %1091 = vmatpush1.msra.mxu0 0.0
        %1092 = vmatprep.subr.mxu0 0.0
        %1093 = vmatpush1.msra.mxu0 0.0
        %1094 = vmatprep.subr.mxu0 0.0
        %1095 = vmatpush1.msra.mxu0 0.0
        %1096 = vmatprep.mubr.f32.mxu0 0.0
        %1097 = vmatmul.mubr.f32.gmra.mrb[0].mxu0 %v954
        %v1098 = vpop.f32.mrb[0].mxu0
        %v1099 = vadd.f32 %v609, %v1098
        %v1100 = vpop.f32.mrb[0].mxu0
        %1101 = vdwg.mxu0
        %v1102 = vadd.f32 %v958, %v1028
        %v1103 = vxor.u32 %v1102, 2147483648
        %v1104 = vmul.f32 %v1103, 1.442695
        %v1105 = vpow.pop %v1104
        %v1106 = vadd.f32 %v1105, 1.0
        %v1107 = vrcp.pop %v1106
        %v1108 = vmul.f32 1.0, %v1107
        %v1109 = vadd.f32 %v959, %v1030
        %v1110 = vxor.u32 %v1109, 2147483648
        %v1111 = vmul.f32 %v1110, 1.442695
        %v1112 = vpow.pop %v1111
        %v1113 = vadd.f32 %v1112, 1.0
        %v1114 = vrcp.pop %v1113
        %v1115 = vmul.f32 1.0, %v1114
        %v1116 = vmul.f32 %v1108, %v1099
        %v1117 = vadd.f32 %v960, %v1116
        %v1118 = vtanh.pop %v1117
        %v1119 = vsub.f32 1.0, %v1115
        %v1120 = vmul.f32 %v1119, %v1118
        %v1121 = vmul.f32 %v1115, %v954
        %v1122 = vadd.f32 %v1120, %v1121
        %s1123 = sadd.s32 %s775, 2
        %p1124 = scmp.lt.s32.totalorder %s1123, 10
        %s1125 = scalar_select %p1124, 1, 0
        %v1126 = vstv %s1125
        %vm1127 = vcmp.eq.s32.totalorder %v1126, 1
        %v1128 = vsel %vm1127, %v1122, %v954
        %s1129 = smul.u32 3, 3
        %s1130 = smul.addr %s1129, 8
        %s1131 = scalar_lea.vmem [#allocation3], %s1130
        %v1132 = vld [vmem:[%s1131] sm:$0xff]
        %v1133 = vld [vmem:[%s1131 + $0x8] sm:$0xff]
        %v1134 = vld [vmem:[%s1131 + $0x10] sm:$0xff]
        %1135 = vmatprep.subr.mxu0 %v542
        %1136 = vmatpush1.msra.mxu0 %v541
        %1137 = vmatprep.subr.mxu0 %v545
        %1138 = vmatpush1.msra.mxu0 %v544
        %1139 = vmatprep.subr.mxu0 %v548
        %1140 = vmatpush1.msra.mxu0 %v547
        %1141 = vmatprep.subr.mxu0 %v551
        %1142 = vmatpush1.msra.mxu0 %v550
        %1143 = vmatprep.subr.mxu0 %v554
        %1144 = vmatpush1.msra.mxu0 %v553
        %1145 = vmatprep.subr.mxu0 %v557
        %1146 = vmatpush1.msra.mxu0 %v556
        %1147 = vmatprep.subr.mxu0 %v560
        %1148 = vmatpush1.msra.mxu0 %v559
        %1149 = vmatprep.subr.mxu0 %v563
        %1150 = vmatpush1.msra.mxu0 %v562
        %1151 = vmatprep.subr.mxu0 %v566
        %1152 = vmatpush1.msra.mxu0 %v565
        %1153 = vmatprep.subr.mxu0 %v569
        %1154 = vmatpush1.msra.mxu0 %v568
        %1155 = vmatprep.subr.mxu0 %v572
        %1156 = vmatpush1.msra.mxu0 %v571
        %1157 = vmatprep.subr.mxu0 %v575
        %1158 = vmatpush1.msra.mxu0 %v574
        %1159 = vmatprep.subr.mxu0 %v578
        %1160 = vmatpush1.msra.mxu0 %v577
        %1161 = vmatprep.subr.mxu0 %v581
        %1162 = vmatpush1.msra.mxu0 %v580
        %1163 = vmatprep.subr.mxu0 %v584
        %1164 = vmatpush1.msra.mxu0 %v583
        %1165 = vmatprep.subr.mxu0 %v587
        %1166 = vmatpush1.msra.mxu0 %v586
        %1167 = vmatprep.subr.mxu0 0.0
        %1168 = vmatpush1.msra.mxu0 0.0
        %1169 = vmatprep.subr.mxu0 0.0
        %1170 = vmatpush1.msra.mxu0 0.0
        %1171 = vmatprep.subr.mxu0 0.0
        %1172 = vmatpush1.msra.mxu0 0.0
        %1173 = vmatprep.subr.mxu0 0.0
        %1174 = vmatpush1.msra.mxu0 0.0
        %1175 = vmatprep.subr.mxu0 0.0
        %1176 = vmatpush1.msra.mxu0 0.0
        %1177 = vmatprep.subr.mxu0 0.0
        %1178 = vmatpush1.msra.mxu0 0.0
        %1179 = vmatprep.subr.mxu0 0.0
        %1180 = vmatpush1.msra.mxu0 0.0
        %1181 = vmatprep.subr.mxu0 0.0
        %1182 = vmatpush1.msra.mxu0 0.0
        %1183 = vmatprep.subr.mxu0 0.0
        %1184 = vmatpush1.msra.mxu0 0.0
        %1185 = vmatprep.subr.mxu0 0.0
        %1186 = vmatpush1.msra.mxu0 0.0
        %1187 = vmatprep.subr.mxu0 0.0
        %1188 = vmatpush1.msra.mxu0 0.0
        %1189 = vmatprep.subr.mxu0 0.0
        %1190 = vmatpush1.msra.mxu0 0.0
        %1191 = vmatprep.subr.mxu0 0.0
        %1192 = vmatpush1.msra.mxu0 0.0
        %1193 = vmatprep.subr.mxu0 0.0
        %1194 = vmatpush1.msra.mxu0 0.0
        %1195 = vmatprep.subr.mxu0 0.0
        %1196 = vmatpush1.msra.mxu0 0.0
        %1197 = vmatprep.subr.mxu0 0.0
        %1198 = vmatpush1.msra.mxu0 0.0
        %1199 = vmatprep.mubr.f32.mxu0 0.0
        %1200 = vmatmul.mubr.f32.gmra.mrb[0].mxu0 %v1128
        %v1201 = vpop.f32.mrb[0].mxu0
        %v1202 = vadd.f32 %v601, %v1201
        %v1203 = vpop.f32.mrb[0].mxu0
        %v1204 = vadd.f32 %v605, %v1203
        %1205 = vdwg.mxu0
        %1206 = vmatprep.subr.mxu0 0.0
        %1207 = vmatpush1.msra.mxu0 %v543
        %1208 = vmatprep.subr.mxu0 0.0
        %1209 = vmatpush1.msra.mxu0 %v546
        %1210 = vmatprep.subr.mxu0 0.0
        %1211 = vmatpush1.msra.mxu0 %v549
        %1212 = vmatprep.subr.mxu0 0.0
        %1213 = vmatpush1.msra.mxu0 %v552
        %1214 = vmatprep.subr.mxu0 0.0
        %1215 = vmatpush1.msra.mxu0 %v555
        %1216 = vmatprep.subr.mxu0 0.0
        %1217 = vmatpush1.msra.mxu0 %v558
        %1218 = vmatprep.subr.mxu0 0.0
        %1219 = vmatpush1.msra.mxu0 %v561
        %1220 = vmatprep.subr.mxu0 0.0
        %1221 = vmatpush1.msra.mxu0 %v564
        %1222 = vmatprep.subr.mxu0 0.0
        %1223 = vmatpush1.msra.mxu0 %v567
        %1224 = vmatprep.subr.mxu0 0.0
        %1225 = vmatpush1.msra.mxu0 %v570
        %1226 = vmatprep.subr.mxu0 0.0
        %1227 = vmatpush1.msra.mxu0 %v573
        %1228 = vmatprep.subr.mxu0 0.0
        %1229 = vmatpush1.msra.mxu0 %v576
        %1230 = vmatprep.subr.mxu0 0.0
        %1231 = vmatpush1.msra.mxu0 %v579
        %1232 = vmatprep.subr.mxu0 0.0
        %1233 = vmatpush1.msra.mxu0 %v582
        %1234 = vmatprep.subr.mxu0 0.0
        %1235 = vmatpush1.msra.mxu0 %v585
        %1236 = vmatprep.subr.mxu0 0.0
        %1237 = vmatpush1.msra.mxu0 %v588
        %1238 = vmatprep.subr.mxu0 0.0
        %1239 = vmatpush1.msra.mxu0 0.0
        %1240 = vmatprep.subr.mxu0 0.0
        %1241 = vmatpush1.msra.mxu0 0.0
        %1242 = vmatprep.subr.mxu0 0.0
        %1243 = vmatpush1.msra.mxu0 0.0
        %1244 = vmatprep.subr.mxu0 0.0
        %1245 = vmatpush1.msra.mxu0 0.0
        %1246 = vmatprep.subr.mxu0 0.0
        %1247 = vmatpush1.msra.mxu0 0.0
        %1248 = vmatprep.subr.mxu0 0.0
        %1249 = vmatpush1.msra.mxu0 0.0
        %1250 = vmatprep.subr.mxu0 0.0
        %1251 = vmatpush1.msra.mxu0 0.0
        %1252 = vmatprep.subr.mxu0 0.0
        %1253 = vmatpush1.msra.mxu0 0.0
        %1254 = vmatprep.subr.mxu0 0.0
        %1255 = vmatpush1.msra.mxu0 0.0
        %1256 = vmatprep.subr.mxu0 0.0
        %1257 = vmatpush1.msra.mxu0 0.0
        %1258 = vmatprep.subr.mxu0 0.0
        %1259 = vmatpush1.msra.mxu0 0.0
        %1260 = vmatprep.subr.mxu0 0.0
        %1261 = vmatpush1.msra.mxu0 0.0
        %1262 = vmatprep.subr.mxu0 0.0
        %1263 = vmatpush1.msra.mxu0 0.0
        %1264 = vmatprep.subr.mxu0 0.0
        %1265 = vmatpush1.msra.mxu0 0.0
        %1266 = vmatprep.subr.mxu0 0.0
        %1267 = vmatpush1.msra.mxu0 0.0
        %1268 = vmatprep.subr.mxu0 0.0
        %1269 = vmatpush1.msra.mxu0 0.0
        %1270 = vmatprep.mubr.f32.mxu0 0.0
        %1271 = vmatmul.mubr.f32.gmra.mrb[0].mxu0 %v1128
        %v1272 = vpop.f32.mrb[0].mxu0
        %v1273 = vadd.f32 %v609, %v1272
        %v1274 = vpop.f32.mrb[0].mxu0
        %1275 = vdwg.mxu0
        %v1276 = vadd.f32 %v1132, %v1202
        %v1277 = vxor.u32 %v1276, 2147483648
        %v1278 = vmul.f32 %v1277, 1.442695
        %v1279 = vpow.pop %v1278
        %v1280 = vadd.f32 %v1279, 1.0
        %v1281 = vrcp.pop %v1280
        %v1282 = vmul.f32 1.0, %v1281
        %v1283 = vadd.f32 %v1133, %v1204
        %v1284 = vxor.u32 %v1283, 2147483648
        %v1285 = vmul.f32 %v1284, 1.442695
        %v1286 = vpow.pop %v1285
        %v1287 = vadd.f32 %v1286, 1.0
        %v1288 = vrcp.pop %v1287
        %v1289 = vmul.f32 1.0, %v1288
        %v1290 = vmul.f32 %v1282, %v1273
        %v1291 = vadd.f32 %v1134, %v1290
        %v1292 = vtanh.pop %v1291
        %v1293 = vsub.f32 1.0, %v1289
        %v1294 = vmul.f32 %v1293, %v1292
        %v1295 = vmul.f32 %v1289, %v1128
        %v1296 = vadd.f32 %v1294, %v1295
        %s1297 = sadd.s32 %s775, 3
        %p1298 = scmp.lt.s32.totalorder %s1297, 10
        %s1299 = scalar_select %p1298, 1, 0
        %v1300 = vstv %s1299
        %vm1301 = vcmp.eq.s32.totalorder %v1300, 1
        %v1302 = vsel %vm1301, %v1296, %v1128
        %1303 = vst [vmem:[#allocation2] sm:$0xff] %v1302
        %p1304 = scmp.eq.s32.totalorder %s26, 2
        // Predicated region
        $region57: #{tpu_custom_call.1} parent=39 // pred_check
          %p1305 = pneg %p1304
        $region58: #{tpu_custom_call.1} parent=39 // pred_check_branch
          %1307 = sbr.rel (%p1305) target = $region60
        $region59: #{tpu_custom_call.1} parent=39 // pred_region
          %1308 = vst [vmem:[#allocation10] sm:$0xff] %v1302
        $region60: #{tpu_custom_call.1} parent=39 // pred_fallthru
          _
        // Predicated region
        $region61: #{tpu_custom_call.1} parent=39 // pred_check
          %p1309 = pneg %p163
        $region62: #{tpu_custom_call.1} parent=39 // pred_check_branch
          %1311 = sbr.rel (%p1309) target = $region64
        $region63: #{tpu_custom_call.1} parent=39 // pred_region
          %s1313 = ssub.s32 128, 128
          %1314 = vsyncadd [#allocation6], %s1313
          %s1315 = smul.addr %s25, 128
          %s1316 = scalar_lea.hbm %s5, %s1315
          %s1318 = sshll.u32 [#allocation10], 4
          %s1319 = int_to_ptr.vmem [resolvable:$true] %s1318
          %1321 = dma.vmem_to_hbm [thread:$0]  %s1319, 128, %s1316, [#allocation6]
        $region64: #{tpu_custom_call.1} parent=39 // pred_fallthru
          _
        // Predicated region
        $region65: #{tpu_custom_call.1} parent=39 // pred_check
          %p1322 = pneg %p163
        $region66: #{tpu_custom_call.1} parent=39 // pred_check_branch
          %1324 = sbr.rel (%p1322) target = $region68
        $region67: #{tpu_custom_call.1} parent=39 // pred_region
          %1325 = dma.done [#allocation6], 128
        $region68: #{tpu_custom_call.1} parent=39 // pred_fallthru
          _
      $region40: #{tpu_custom_call.1} parent=5 // pred_fallthru
        _
      %p1326 = scmp.le.s32.totalorder 2, %s16
      // Predicated region
      $region69: #{tpu_custom_call.1} parent=5 // pred_check
        %p1327 = pneg %p1326
      $region70: #{tpu_custom_call.1} parent=5 // pred_check_branch
        %1329 = sbr.rel (%p1327) target = $region72
      $region71: #{tpu_custom_call.1} parent=5 // pred_region
        %s1330 = ssub.s32 %s16, 2
      $region72: #{tpu_custom_call.1} parent=5 // pred_fallthru
        _
    $region6: #{tpu_custom_call.1} parent=1 // loop_footer
      %s20 = sadd.s32 1, %s16
    $region7: #{tpu_custom_call.1} parent=1 // loop_footer_branch
      %15 = sbr.rel target = $region3
    $region8: #{tpu_custom_call.1} parent=1 // loop_exit
      _
    %1331 = vsyncpa [#allocation5], 1
    %s1332 = scalar_lea.sflag [#allocation5], 1
    %1333 = vsyncpa %s1332, 1
    %1334 = vsyncpa [#allocation8], 1
    %1335 = vsyncpa [#allocation6], 1
    %s1336 = scalar_lea.sflag [#allocation6], 1
    %1337 = vsyncpa %s1336, 1

</llo_original>
